<compile_context>
chip_gen: v7x
topology: tpu7x:2x2x1
jax: 0.10.0
libtpu: 0.0.40
codegen_flags: <defaults>
</compile_context>

<pallas_src>
import functools

import jax
import jax.numpy as jnp
from jax.experimental import pallas as pl
from jax.experimental.pallas import tpu as pltpu


def _round_up(x, m):
    return (x + m - 1) // m * m


def _vmem_limit_bytes():
    cap = 64 * 1024 * 1024
    try:
        info = pltpu.get_tpu_info()
        cap = int(getattr(info, "vmem_capacity_bytes", cap))
    except Exception:
        pass
    return min(max(int(cap * 3 // 4), 32 * 1024 * 1024), 96 * 1024 * 1024)


def _choose_tho(ho, wo, c4pad, cout_pad, n):
    """Pick output-row tile THO: exact divisor of Ho (stats stay exact), last block dim legal
    ((THO*Wo) % 128 == 0 unless a single tile), modest per-step VMEM, and >=2 total grid steps
    when possible so both v7x TensorCores get work."""
    budget = 20 * 1024 * 1024
    valid = []
    for tho in range(ho, 0, -1):
        if ho % tho:
            continue
        num_t = ho // tho
        tm = tho * wo
        if num_t > 1 and tm % 128 != 0:
            continue
        # rough per-step working set: 4 lhs slices (bf16) + f32 accumulator + 2x bf16 y block
        step_bytes = tm * c4pad * 2 * 4 + tm * cout_pad * (4 + 2 * 2)
        if step_bytes > budget:
            continue
        valid.append(tho)
    if not valid:
        return ho
    for tho in valid:                      # largest first
        if n * (ho // tho) >= 2:
            return tho
    return valid[0]


def downsample_conv(x, weight, bias=None, gamma=None, beta=None, *,
                    kernel=4, strides=2, padding=1,
                    activation=True, batchnorm=True, eps=1e-5):
    """x: (N, Cin, H, W) f32 NCHW. weight: (Cout, Cin, 4, 4). Returns NCHW f32."""
    assert kernel == 4 and strides == 2 and padding == 1, \
        "specialized to DownSampleConv defaults (k=4, s=2, p=1)"
    N, Cin, H, W = x.shape
    Cout = weight.shape[0]
    Ho = (H + 2 * padding - kernel) // strides + 1
    Wo = (W + 2 * padding - kernel) // strides + 1

    # ---- wrapper-side layout prep (single input-sized pass; replaces the 4x im2col slab) ----
    Hp2 = _round_up(H + 2 * padding, 2)
    Wp2 = _round_up(W + 2 * padding, 2)
    H2, W2 = Hp2 // 2, Wp2 // 2
    C4 = 4 * Cin
    C4PAD = _round_up(C4, 128)
    COUT_PAD = _round_up(Cout, 128)

    xb = x.astype(jnp.bfloat16)
    xb = jnp.pad(xb, ((0, 0), (0, 0),
                      (padding, Hp2 - H - padding),
                      (padding, Wp2 - W - padding)))
    # NCHW -> space-to-depth NHWC': xs[n, h2, w2, (dy, dx, ci)] = x_pad[n, ci, 2*h2+dy, 2*w2+dx]
    xs = xb.reshape(N, Cin, H2, 2, W2, 2).transpose(0, 2, 4, 3, 5, 1).reshape(N, H2, W2, C4)
    xs = jnp.pad(xs, ((0, 0), (0, 0), (0, 0), (0, C4PAD - C4)))

    # conv weight -> 4 stride-1 sub-filters: w2[2*dh+dw][(dy*2+dx)*Cin + ci, co]
    w2 = weight.astype(jnp.bfloat16).transpose(2, 3, 1, 0)              # (kh, kw, Cin, Cout)
    w2 = w2.reshape(2, 2, 2, 2, Cin, Cout).transpose(0, 2, 1, 3, 4, 5)  # (dh, dw, dy, dx, ci, co)
    w2 = w2.reshape(4, C4, Cout)
    w2 = jnp.pad(w2, ((0, 0), (0, C4PAD - C4), (0, COUT_PAD - Cout)))

    THO = _choose_tho(Ho, Wo, C4PAD, COUT_PAD, N)
    NUM_T = Ho // THO
    TM = THO * Wo
    M_total = N * Ho * Wo

    cparams = pltpu.CompilerParams(
        dimension_semantics=("parallel", "parallel"),
        vmem_limit_bytes=_vmem_limit_bytes(),
    )

    # ---- pass 1: fused space-to-depth conv (4 MXU matmuls / tile) + per-tile BN stats -------
    def conv_stats_kernel(x_ref, w_ref, y_ref, stats_ref):
        t = pl.program_id(1)
        acc = None
        for dh in range(2):
            for dw in range(2):
                lhs = x_ref[0, pl.ds(t * THO + dh, THO), pl.ds(dw, Wo), :]   # (THO, Wo, C4PAD)
                lhs = lhs.reshape(TM, C4PAD)
                part = jnp.dot(lhs, w_ref[2 * dh + dw],
                               preferred_element_type=jnp.float32)           # (TM, COUT_PAD)
                acc = part if acc is None else acc + part
        # per-tile per-channel stats: sum + centered sum-of-squares (numerically stable combine)
        s = jnp.sum(acc, axis=0, keepdims=True)                              # (1, COUT_PAD)
        mu = s * (1.0 / TM)
        d = acc - mu
        m2 = jnp.sum(d * d, axis=0, keepdims=True)                           # (1, COUT_PAD)
        stats_ref[0] = jnp.concatenate([s, m2], axis=0)
        # channel-major write so the final NCHW output needs no XLA transpose
        y_ref[0] = jnp.transpose(acc).astype(y_ref.dtype)

    y, stats = pl.pallas_call(
        conv_stats_kernel,
        out_shape=(jax.ShapeDtypeStruct((N, COUT_PAD, Ho * Wo), jnp.bfloat16),
                   jax.ShapeDtypeStruct((N * NUM_T, 2, COUT_PAD), jnp.float32)),
        grid_spec=pltpu.PrefetchScalarGridSpec(
            num_scalar_prefetch=0,
            grid=(N, NUM_T),
            in_specs=[
                # whole space-to-depth image of sample n: resident across the t axis
                pl.BlockSpec((1, H2, W2, C4PAD), lambda n, t: (n, 0, 0, 0)),
                # flattened conv weight: constant index_map -> fetched once, resident in VMEM
                pl.BlockSpec((4, C4PAD, COUT_PAD), lambda n, t: (0, 0, 0)),
            ],
            out_specs=[
                pl.BlockSpec((1, COUT_PAD, TM), lambda n, t: (n, 0, t)),
                pl.BlockSpec((1, 2, COUT_PAD), lambda n, t: (n * NUM_T + t, 0, 0)),
            ],
        ),
        compiler_params=cparams,
    )(xs, w2)

    # ---- fold BN into one per-channel scale/shift (tiny XLA math) ----------------------------
    if batchnorm:
        sums = stats[:, 0, :]                                  # (N*NUM_T, COUT_PAD)
        m2s = stats[:, 1, :]
        count = float(TM)
        mean = jnp.sum(sums, axis=0) / M_total
        tile_mean = sums / count
        var = (jnp.sum(m2s, axis=0)
               + count * jnp.sum((tile_mean - mean[None, :]) ** 2, axis=0)) / M_total
        g = jnp.pad(gamma.astype(jnp.float32), (0, COUT_PAD - Cout))
        b = jnp.pad(beta.astype(jnp.float32), (0, COUT_PAD - Cout))
        scale = g * jax.lax.rsqrt(var + eps)
        shift = b - mean * scale
        # conv bias is exactly cancelled by the train-mode mean subtraction -> dropped.
    else:
        scale = jnp.ones((COUT_PAD,), jnp.float32)
        bb = jnp.zeros((Cout,), jnp.float32) if bias is None else bias.astype(jnp.float32)
        shift = jnp.pad(bb, (0, COUT_PAD - Cout))
    scale = scale.reshape(1, COUT_PAD, 1)
    shift = shift.reshape(1, COUT_PAD, 1)

    # ---- pass 2: y*scale + shift (+ LeakyReLU), already channel-major => NCHW for free -------
    def bn_act_kernel(y_ref, scale_ref, shift_ref, o_ref):
        v = y_ref[...].astype(jnp.float32) * scale_ref[...] + shift_ref[...]
        if activation:
            v = jnp.where(v >= 0.0, v, 0.2 * v)
        o_ref[...] = v[:, :Cout, :]

    out = pl.pallas_call(
        bn_act_kernel,
        out_shape=jax.ShapeDtypeStruct((N, Cout, Ho * Wo), jnp.float32),
        grid_spec=pltpu.PrefetchScalarGridSpec(
            num_scalar_prefetch=0,
            grid=(N, NUM_T),
            in_specs=[
                pl.BlockSpec((1, COUT_PAD, TM), lambda n, t: (n, 0, t)),
                pl.BlockSpec((1, COUT_PAD, 1), lambda n, t: (0, 0, 0)),
                pl.BlockSpec((1, COUT_PAD, 1), lambda n, t: (0, 0, 0)),
            ],
            out_specs=pl.BlockSpec((1, Cout, TM), lambda n, t: (n, 0, t)),
        ),
        compiler_params=cparams,
    )(y, scale, shift)

    return out.reshape(N, Cout, Ho, Wo)      # metadata-only reshape, no transpose


if __name__ == "__main__":
    key = jax.random.PRNGKey(0)
    k_x, k_w, k_b = jax.random.split(key, 3)

    N, Cin, H, W = 2, 4, 16, 16
    Cout, K = 8, 4

    x = jax.random.normal(k_x, (N, Cin, H, W), dtype=jnp.float32)
    fan_in = Cin * K * K
    weight = jax.random.normal(k_w, (Cout, Cin, K, K), dtype=jnp.float32) / jnp.sqrt(fan_in)
    bias = jax.random.normal(k_b, (Cout,), dtype=jnp.float32) * 0.1
    gamma = jnp.ones((Cout,), dtype=jnp.float32)    # BatchNorm2d default weight
    beta = jnp.zeros((Cout,), dtype=jnp.float32)    # BatchNorm2d default bias

    fn = jax.jit(functools.partial(downsample_conv))
    y = fn(x, weight, bias, gamma, beta)
    jax.block_until_ready(y)
    assert y.shape == (N, Cout, H // 2, W // 2), y.shape
    assert bool(jnp.all(jnp.isfinite(y)))

    # reference with the same bf16 rounding of inputs/weights the kernel uses
    xr = x.astype(jnp.bfloat16).astype(jnp.float32)
    wr = weight.astype(jnp.bfloat16).astype(jnp.float32)
    conv = jax.lax.conv_general_dilated(xr, wr, (2, 2), ((1, 1), (1, 1)),
                                        dimension_numbers=("NCHW", "OIHW", "NCHW"))
    conv = conv + bias.reshape(1, -1, 1, 1)
    mu = conv.mean(axis=(0, 2, 3), keepdims=True)
    var = conv.var(axis=(0, 2, 3), keepdims=True)
    ref = (conv - mu) * jax.lax.rsqrt(var + 1e-5) * gamma.reshape(1, -1, 1, 1) \
        + beta.reshape(1, -1, 1, 1)
    ref = jnp.where(ref >= 0, ref, 0.2 * ref)
    assert bool(jnp.allclose(y, ref, atol=7.5e-2, rtol=7.5e-2)), \
        float(jnp.max(jnp.abs(y - ref)))

    print("KERNEL_OK")
</pallas_src>

<mosaic_0001>
module attributes {stable_mosaic.version = 11 : i64} {
  func.func @conv_stats_kernel(%arg0: i32, %arg1: i32, %arg2: memref<1x9x9x128xbf16, #tpu.memory_space<vmem>>, %arg3: memref<4x128x128xbf16, #tpu.memory_space<vmem>>, %arg4: memref<1x128x64xbf16, #tpu.memory_space<vmem>>, %arg5: memref<1x2x128xf32, #tpu.memory_space<vmem>>) attributes {dimension_semantics = [#tpu.dimension_semantics<parallel>, #tpu.dimension_semantics<parallel>], iteration_bounds = array<i64: 2, 1>, scalar_prefetch = 0 : i64, scratch_operands = 0 : i64, tpu.core_type = #tpu.core_type<tc>, window_params = [{transform_indices = @transform_0, window_bounds = array<i64: 1, 9, 9, 128>}, {pipeline_mode = #tpu.pipeline_mode<synchronous>, transform_indices = @transform_1, window_bounds = array<i64: 4, 128, 128>}, {transform_indices = @transform_2, window_bounds = array<i64: 1, 128, 64>}, {transform_indices = @transform_3, window_bounds = array<i64: 1, 2, 128>}]} {
    %c8_i32 = arith.constant 8 : i32
    %0 = arith.muli %arg1, %c8_i32 : i32
    %c0_i32 = arith.constant 0 : i32
    %1 = arith.addi %0, %c0_i32 : i32
    %c0 = arith.constant 0 : index
    %2 = arith.index_cast %1 : i32 to index
    %c0_0 = arith.constant 0 : index
    %c0_1 = arith.constant 0 : index
    %3 = vector.load %arg2[%c0, %2, %c0_0, %c0_1] : memref<1x9x9x128xbf16, #tpu.memory_space<vmem>>, vector<1x8x8x128xbf16>
    %4 = vector.shape_cast %3 : vector<1x8x8x128xbf16> to vector<8x8x128xbf16>
    %5 = vector.shape_cast %4 : vector<8x8x128xbf16> to vector<64x128xbf16>
    %c0_2 = arith.constant 0 : index
    %c0_3 = arith.constant 0 : index
    %c0_4 = arith.constant 0 : index
    %6 = vector.load %arg3[%c0_2, %c0_3, %c0_4] : memref<4x128x128xbf16, #tpu.memory_space<vmem>>, vector<1x128x128xbf16>
    %7 = vector.shape_cast %6 : vector<1x128x128xbf16> to vector<128x128xbf16>
    %cst = arith.constant dense<0.000000e+00> : vector<64x128xf32>
    %8 = tpu.matmul %5, %7, %cst {dimension_numbers = #tpu.dot_dimension_numbers<[1], [0], [0], [1], [0, 0, 1, 1], [], []>} : vector<64x128xbf16>, vector<128x128xbf16>, vector<64x128xf32> -> vector<64x128xf32>
    %c8_i32_5 = arith.constant 8 : i32
    %9 = arith.muli %arg1, %c8_i32_5 : i32
    %c0_i32_6 = arith.constant 0 : i32
    %10 = arith.addi %9, %c0_i32_6 : i32
    %c0_7 = arith.constant 0 : index
    %11 = arith.index_cast %10 : i32 to index
    %c1 = arith.constant 1 : index
    %c0_8 = arith.constant 0 : index
    %12 = vector.load %arg2[%c0_7, %11, %c1, %c0_8] : memref<1x9x9x128xbf16, #tpu.memory_space<vmem>>, vector<1x8x8x128xbf16>
    %13 = vector.shape_cast %12 : vector<1x8x8x128xbf16> to vector<8x8x128xbf16>
    %14 = vector.shape_cast %13 : vector<8x8x128xbf16> to vector<64x128xbf16>
    %c1_9 = arith.constant 1 : index
    %c0_10 = arith.constant 0 : index
    %c0_11 = arith.constant 0 : index
    %15 = vector.load %arg3[%c1_9, %c0_10, %c0_11] : memref<4x128x128xbf16, #tpu.memory_space<vmem>>, vector<1x128x128xbf16>
    %16 = vector.shape_cast %15 : vector<1x128x128xbf16> to vector<128x128xbf16>
    %cst_12 = arith.constant dense<0.000000e+00> : vector<64x128xf32>
    %17 = tpu.matmul %14, %16, %cst_12 {dimension_numbers = #tpu.dot_dimension_numbers<[1], [0], [0], [1], [0, 0, 1, 1], [], []>} : vector<64x128xbf16>, vector<128x128xbf16>, vector<64x128xf32> -> vector<64x128xf32>
    %18 = arith.addf %8, %17 : vector<64x128xf32>
    %c8_i32_13 = arith.constant 8 : i32
    %19 = arith.muli %arg1, %c8_i32_13 : i32
    %c1_i32 = arith.constant 1 : i32
    %20 = arith.addi %19, %c1_i32 : i32
    %c0_14 = arith.constant 0 : index
    %21 = arith.index_cast %20 : i32 to index
    %c0_15 = arith.constant 0 : index
    %c0_16 = arith.constant 0 : index
    %22 = vector.load %arg2[%c0_14, %21, %c0_15, %c0_16] : memref<1x9x9x128xbf16, #tpu.memory_space<vmem>>, vector<1x8x8x128xbf16>
    %23 = vector.shape_cast %22 : vector<1x8x8x128xbf16> to vector<8x8x128xbf16>
    %24 = vector.shape_cast %23 : vector<8x8x128xbf16> to vector<64x128xbf16>
    %c2 = arith.constant 2 : index
    %c0_17 = arith.constant 0 : index
    %c0_18 = arith.constant 0 : index
    %25 = vector.load %arg3[%c2, %c0_17, %c0_18] : memref<4x128x128xbf16, #tpu.memory_space<vmem>>, vector<1x128x128xbf16>
    %26 = vector.shape_cast %25 : vector<1x128x128xbf16> to vector<128x128xbf16>
    %cst_19 = arith.constant dense<0.000000e+00> : vector<64x128xf32>
    %27 = tpu.matmul %24, %26, %cst_19 {dimension_numbers = #tpu.dot_dimension_numbers<[1], [0], [0], [1], [0, 0, 1, 1], [], []>} : vector<64x128xbf16>, vector<128x128xbf16>, vector<64x128xf32> -> vector<64x128xf32>
    %28 = arith.addf %18, %27 : vector<64x128xf32>
    %c8_i32_20 = arith.constant 8 : i32
    %29 = arith.muli %arg1, %c8_i32_20 : i32
    %c1_i32_21 = arith.constant 1 : i32
    %30 = arith.addi %29, %c1_i32_21 : i32
    %c0_22 = arith.constant 0 : index
    %31 = arith.index_cast %30 : i32 to index
    %c1_23 = arith.constant 1 : index
    %c0_24 = arith.constant 0 : index
    %32 = vector.load %arg2[%c0_22, %31, %c1_23, %c0_24] : memref<1x9x9x128xbf16, #tpu.memory_space<vmem>>, vector<1x8x8x128xbf16>
    %33 = vector.shape_cast %32 : vector<1x8x8x128xbf16> to vector<8x8x128xbf16>
    %34 = vector.shape_cast %33 : vector<8x8x128xbf16> to vector<64x128xbf16>
    %c3 = arith.constant 3 : index
    %c0_25 = arith.constant 0 : index
    %c0_26 = arith.constant 0 : index
    %35 = vector.load %arg3[%c3, %c0_25, %c0_26] : memref<4x128x128xbf16, #tpu.memory_space<vmem>>, vector<1x128x128xbf16>
    %36 = vector.shape_cast %35 : vector<1x128x128xbf16> to vector<128x128xbf16>
    %cst_27 = arith.constant dense<0.000000e+00> : vector<64x128xf32>
    %37 = tpu.matmul %34, %36, %cst_27 {dimension_numbers = #tpu.dot_dimension_numbers<[1], [0], [0], [1], [0, 0, 1, 1], [], []>} : vector<64x128xbf16>, vector<128x128xbf16>, vector<64x128xf32> -> vector<64x128xf32>
    %38 = arith.addf %28, %37 : vector<64x128xf32>
    %cst_28 = arith.constant dense<0.000000e+00> : vector<128xf32>
    %39 = vector.multi_reduction <add>, %38, %cst_28 [0] : vector<64x128xf32> to vector<128xf32>
    %40 = vector.shape_cast %39 : vector<128xf32> to vector<1x128xf32>
    %cst_29 = arith.constant 1.562500e-02 : f32
    %41 = vector.broadcast %cst_29 : f32 to vector<1x128xf32>
    %42 = arith.mulf %40, %41 : vector<1x128xf32>
    %43 = vector.broadcast %42 : vector<1x128xf32> to vector<64x128xf32>
    %44 = arith.subf %38, %43 : vector<64x128xf32>
    %45 = arith.mulf %44, %44 : vector<64x128xf32>
    %cst_30 = arith.constant dense<0.000000e+00> : vector<128xf32>
    %46 = vector.multi_reduction <add>, %45, %cst_30 [0] : vector<64x128xf32> to vector<128xf32>
    %47 = vector.shape_cast %46 : vector<128xf32> to vector<1x128xf32>
    %48 = tpu.concatenate %40, %47 in 0 : vector<1x128xf32>, vector<1x128xf32> -> vector<2x128xf32>
    %c0_31 = arith.constant 0 : index
    %c0_32 = arith.constant 0 : index
    %c0_33 = arith.constant 0 : index
    %49 = vector.load %arg5[%c0_31, %c0_32, %c0_33] : memref<1x2x128xf32, #tpu.memory_space<vmem>>, vector<1x2x128xf32>
    %50 = vector.shape_cast %49 : vector<1x2x128xf32> to vector<2x128xf32>
    %51 = vector.shape_cast %48 : vector<2x128xf32> to vector<1x2x128xf32>
    tpu.vector_store %arg5[%c0_31, %c0_32, %c0_33], %51 {strides = array<i32>} : memref<1x2x128xf32, #tpu.memory_space<vmem>>, vector<1x2x128xf32>,
    %52 = tpu.transpose %38, [1, 0] : vector<64x128xf32> -> vector<128x64xf32>
    %53 = arith.truncf %52 : vector<128x64xf32> to vector<128x64xbf16>
    %c0_34 = arith.constant 0 : index
    %c0_35 = arith.constant 0 : index
    %c0_36 = arith.constant 0 : index
    %54 = vector.load %arg4[%c0_34, %c0_35, %c0_36] : memref<1x128x64xbf16, #tpu.memory_space<vmem>>, vector<1x128x64xbf16>
    %55 = vector.shape_cast %54 : vector<1x128x64xbf16> to vector<128x64xbf16>
    %56 = vector.shape_cast %53 : vector<128x64xbf16> to vector<1x128x64xbf16>
    tpu.vector_store %arg4[%c0_34, %c0_35, %c0_36], %56 {strides = array<i32>} : memref<1x128x64xbf16, #tpu.memory_space<vmem>>, vector<1x128x64xbf16>,
    return
  }
  func.func @transform_0(%arg0: i32, %arg1: i32) -> (i32, i32, i32, i32) {
    %c0_i32 = arith.constant 0 : i32
    %c0_i32_0 = arith.constant 0 : i32
    %c0_i32_1 = arith.constant 0 : i32
    %c0_i32_2 = arith.constant 0 : i32
    return %arg0, %c0_i32, %c0_i32_0, %c0_i32_1 : i32, i32, i32, i32
  }
  func.func @transform_1(%arg0: i32, %arg1: i32) -> (i32, i32, i32) {
    %c0_i32 = arith.constant 0 : i32
    %c0_i32_0 = arith.constant 0 : i32
    %c0_i32_1 = arith.constant 0 : i32
    %c0_i32_2 = arith.constant 0 : i32
    return %c0_i32, %c0_i32_0, %c0_i32_1 : i32, i32, i32
  }
  func.func @transform_2(%arg0: i32, %arg1: i32) -> (i32, i32, i32) {
    %c0_i32 = arith.constant 0 : i32
    %c0_i32_0 = arith.constant 0 : i32
    return %arg0, %c0_i32, %arg1 : i32, i32, i32
  }
  func.func @transform_3(%arg0: i32, %arg1: i32) -> (i32, i32, i32) {
    %c1_i32 = arith.constant 1 : i32
    %0 = arith.muli %arg0, %c1_i32 : i32
    %1 = arith.addi %0, %arg1 : i32
    %c0_i32 = arith.constant 0 : i32
    %c0_i32_0 = arith.constant 0 : i32
    %c0_i32_1 = arith.constant 0 : i32
    return %1, %c0_i32, %c0_i32_0 : i32, i32, i32
  }
}

module attributes {stable_mosaic.version = 11 : i64} {
  func.func @bn_act_kernel(%arg0: i32, %arg1: i32, %arg2: memref<1x128x64xbf16, #tpu.memory_space<vmem>>, %arg3: memref<1x128x1xf32, #tpu.memory_space<vmem>>, %arg4: memref<1x128x1xf32, #tpu.memory_space<vmem>>, %arg5: memref<1x8x64xf32, #tpu.memory_space<vmem>>) attributes {dimension_semantics = [#tpu.dimension_semantics<parallel>, #tpu.dimension_semantics<parallel>], iteration_bounds = array<i64: 2, 1>, scalar_prefetch = 0 : i64, scratch_operands = 0 : i64, tpu.core_type = #tpu.core_type<tc>, window_params = [{transform_indices = @transform_0, window_bounds = array<i64: 1, 128, 64>}, {pipeline_mode = #tpu.pipeline_mode<synchronous>, transform_indices = @transform_1, window_bounds = array<i64: 1, 128, 1>}, {pipeline_mode = #tpu.pipeline_mode<synchronous>, transform_indices = @transform_2, window_bounds = array<i64: 1, 128, 1>}, {transform_indices = @transform_3, window_bounds = array<i64: 1, 8, 64>}]} {
    %c0 = arith.constant 0 : index
    %c0_0 = arith.constant 0 : index
    %c0_1 = arith.constant 0 : index
    %0 = vector.load %arg2[%c0, %c0_0, %c0_1] : memref<1x128x64xbf16, #tpu.memory_space<vmem>>, vector<1x128x64xbf16>
    %1 = arith.extf %0 : vector<1x128x64xbf16> to vector<1x128x64xf32>
    %c0_2 = arith.constant 0 : index
    %c0_3 = arith.constant 0 : index
    %c0_4 = arith.constant 0 : index
    %2 = vector.load %arg3[%c0_2, %c0_3, %c0_4] : memref<1x128x1xf32, #tpu.memory_space<vmem>>, vector<1x128x1xf32>
    %3 = vector.broadcast %2 : vector<1x128x1xf32> to vector<1x128x64xf32>
    %4 = arith.mulf %1, %3 : vector<1x128x64xf32>
    %c0_5 = arith.constant 0 : index
    %c0_6 = arith.constant 0 : index
    %c0_7 = arith.constant 0 : index
    %5 = vector.load %arg4[%c0_5, %c0_6, %c0_7] : memref<1x128x1xf32, #tpu.memory_space<vmem>>, vector<1x128x1xf32>
    %6 = vector.broadcast %5 : vector<1x128x1xf32> to vector<1x128x64xf32>
    %7 = arith.addf %4, %6 : vector<1x128x64xf32>
    %cst = arith.constant 0.000000e+00 : f32
    %8 = vector.broadcast %cst : f32 to vector<1x128x64xf32>
    %9 = arith.cmpf oge, %7, %8 : vector<1x128x64xf32>
    %cst_8 = arith.constant 2.000000e-01 : f32
    %10 = vector.broadcast %cst_8 : f32 to vector<1x128x64xf32>
    %11 = arith.mulf %10, %7 : vector<1x128x64xf32>
    %12 = arith.select %9, %7, %11 : vector<1x128x64xi1>, vector<1x128x64xf32>
    %13 = vector.extract_strided_slice %12 {offsets = [0, 0, 0], sizes = [1, 8, 64], strides = [1, 1, 1]} : vector<1x128x64xf32> to vector<1x8x64xf32>
    %c0_9 = arith.constant 0 : index
    %c0_10 = arith.constant 0 : index
    %c0_11 = arith.constant 0 : index
    %14 = vector.load %arg5[%c0_9, %c0_10, %c0_11] : memref<1x8x64xf32, #tpu.memory_space<vmem>>, vector<1x8x64xf32>
    tpu.vector_store %arg5[%c0_9, %c0_10, %c0_11], %13 {strides = array<i32>} : memref<1x8x64xf32, #tpu.memory_space<vmem>>, vector<1x8x64xf32>,
    return
  }
  func.func @transform_0(%arg0: i32, %arg1: i32) -> (i32, i32, i32) {
    %c0_i32 = arith.constant 0 : i32
    %c0_i32_0 = arith.constant 0 : i32
    return %arg0, %c0_i32, %arg1 : i32, i32, i32
  }
  func.func @transform_1(%arg0: i32, %arg1: i32) -> (i32, i32, i32) {
    %c0_i32 = arith.constant 0 : i32
    %c0_i32_0 = arith.constant 0 : i32
    %c0_i32_1 = arith.constant 0 : i32
    %c0_i32_2 = arith.constant 0 : i32
    return %c0_i32, %c0_i32_0, %c0_i32_1 : i32, i32, i32
  }
  func.func @transform_2(%arg0: i32, %arg1: i32) -> (i32, i32, i32) {
    %c0_i32 = arith.constant 0 : i32
    %c0_i32_0 = arith.constant 0 : i32
    %c0_i32_1 = arith.constant 0 : i32
    %c0_i32_2 = arith.constant 0 : i32
    return %c0_i32, %c0_i32_0, %c0_i32_1 : i32, i32, i32
  }
  func.func @transform_3(%arg0: i32, %arg1: i32) -> (i32, i32, i32) {
    %c0_i32 = arith.constant 0 : i32
    %c0_i32_0 = arith.constant 0 : i32
    return %arg0, %c0_i32, %arg1 : i32, i32, i32
  }
}

</mosaic_0001>

<llo_original>
// kernel: downsample_conv.3
$region0: #{downsample_conv.3}
  #allocation0 [shape = 'u32[]', space=smem, size = 0x4, offset = 0x4, fixed_abs, tag = 'smem constant byte address 0x4 - core index']
  #allocation1 [shape = 'u32[144,128]{1,0:T(1,128)}', space=vmem, size = 0x12000, scoped, tag = 'internal scratch']
  %s0 = inlined_call_operand.vmem [shape: bf16[2,128,64], index: 0, kind: input, shape index: {}]
  %s1 = inlined_call_operand.vmem [shape: f32[1,128,1], index: 1, kind: input, shape index: {}]
  %s2 = inlined_call_operand.vmem [shape: f32[1,128,1], index: 2, kind: input, shape index: {}]
  %s3 = inlined_call_operand.vmem [shape: f32[2,8,64], index: 3, kind: output, shape index: {}]
  %s4 = sld [smem:[#allocation0]]
  $region45: #{downsample_conv.3} parent=0
    _
  %s6 = ssub.s32 1, %s4
  %s7 = scalar_select 0, %s6, %s4
  loop: start=0, step=1, limit=4
  $region2: #{downsample_conv.3} parent=0 // loop_pre_header
    _
  $region3: #{downsample_conv.3} parent=0 // loop_header
    %s9 = sphi 0, %s13
    %p10 = scmp.ge.s32.totalorder %s9, 4
    %s16 = sphi 0, %s28
    %s17 = sphi 0, %s24
    %s18 = sphi 0, %s16
    %s19 = sphi 0, %s17
    %s20 = sphi 0, %s18
    %s21 = sphi 0, %s19
    %s33 = sphi 0, %s35
    %s36 = sphi 0, %s33
    %s37 = sphi 0, %s36
    %s53 = sphi 0, %s37
    %s57 = sphi 0, %s57
    %s59 = sphi 0, %s57
    %s60 = sphi 0, %s59
    %s74 = sphi 0, %s60
    %s78 = sphi 0, %s78
    %s80 = sphi 0, %s78
    %s81 = sphi 0, %s80
    %s95 = sphi 0, %s81
    %s103 = sphi 0, %s105
    %s106 = sphi 0, %s103
    %s107 = sphi 0, %s106
    %s123 = sphi 0, %s107
  $region4: #{downsample_conv.3} parent=0 // loop_header_branch
    %12 = sbr.rel (%p10) target = $region8
  $region5: #{downsample_conv.3} parent=0 // loop_body
    %s14 = ssub.s32 %s9, 1
    %s15 = ssub.s32 %s9, 2
    %s22 = sadd.s32 1, %s17
    %p23 = scmp.ge.s32.totalorder %s22, 1
    %s24 = scalar_select %p23, 0, %s22
    %s25 = sadd.s32 1, %s16
    %s26 = scalar_select %p23, %s25, %s16
    %p27 = scmp.ge.s32.totalorder %s26, 2
    %s28 = scalar_select %p27, 0, %s26
    %s29 = ssub.s32 %s16, %s28
    %s30 = ssub.s32 %s17, %s24
    %s31 = sor.u32 %s29, %s30
    %p32 = scmp.eq.s32.totalorder %s31, 0
    %s34 = sadd.s32 %s33, 1
    %s35 = scalar_select %p32, %s33, %s34
    %p38 = pneg %p32
    %p39 = scmp.eq.s32.totalorder %s9, 1
    %p40 = por %p38, %p39
    %p41 = scmp.ne.s32.totalorder %s33, %s36
    %p42 = scmp.eq.s32.totalorder %s9, 0
    %p43 = por %p41, %p42
    %p44 = scmp.ne.s32.totalorder %s33, %s36
    %p45 = scmp.eq.s32.totalorder %s14, 1
    %p46 = por %p44, %p45
    %p47 = scmp.ne.s32.totalorder %s36, %s37
    %p48 = scmp.eq.s32.totalorder %s14, 0
    %p49 = por %p47, %p48
    %p50 = scmp.ne.s32.totalorder %s36, %s37
    %p51 = scmp.eq.s32.totalorder %s15, 1
    %p52 = por %p50, %p51
    %p54 = scmp.ne.s32.totalorder %s37, %s53
    %p55 = scmp.eq.s32.totalorder %s15, 0
    %p56 = por %p54, %p55
    %s58 = sadd.s32 %s57, 1
    %p61 = scmp.eq.s32.totalorder %s9, 1
    %p62 = scmp.ne.s32.totalorder %s57, %s59
    %p63 = scmp.eq.s32.totalorder %s9, 0
    %p64 = por %p62, %p63
    %p65 = scmp.ne.s32.totalorder %s57, %s59
    %p66 = scmp.eq.s32.totalorder %s14, 1
    %p67 = por %p65, %p66
    %p68 = scmp.ne.s32.totalorder %s59, %s60
    %p69 = scmp.eq.s32.totalorder %s14, 0
    %p70 = por %p68, %p69
    %p71 = scmp.ne.s32.totalorder %s59, %s60
    %p72 = scmp.eq.s32.totalorder %s15, 1
    %p73 = por %p71, %p72
    %p75 = scmp.ne.s32.totalorder %s60, %s74
    %p76 = scmp.eq.s32.totalorder %s15, 0
    %p77 = por %p75, %p76
    %s79 = sadd.s32 %s78, 1
    %p82 = scmp.eq.s32.totalorder %s9, 1
    %p83 = scmp.ne.s32.totalorder %s78, %s80
    %p84 = scmp.eq.s32.totalorder %s9, 0
    %p85 = por %p83, %p84
    %p86 = scmp.ne.s32.totalorder %s78, %s80
    %p87 = scmp.eq.s32.totalorder %s14, 1
    %p88 = por %p86, %p87
    %p89 = scmp.ne.s32.totalorder %s80, %s81
    %p90 = scmp.eq.s32.totalorder %s14, 0
    %p91 = por %p89, %p90
    %p92 = scmp.ne.s32.totalorder %s80, %s81
    %p93 = scmp.eq.s32.totalorder %s15, 1
    %p94 = por %p92, %p93
    %p96 = scmp.ne.s32.totalorder %s81, %s95
    %p97 = scmp.eq.s32.totalorder %s15, 0
    %p98 = por %p96, %p97
    %s99 = ssub.s32 %s16, %s28
    %s100 = ssub.s32 %s17, %s24
    %s101 = sor.u32 %s99, %s100
    %p102 = scmp.eq.s32.totalorder %s101, 0
    %s104 = sadd.s32 %s103, 1
    %s105 = scalar_select %p102, %s103, %s104
    %p108 = pneg %p102
    %p109 = scmp.eq.s32.totalorder %s9, 1
    %p110 = por %p108, %p109
    %p111 = scmp.ne.s32.totalorder %s103, %s106
    %p112 = scmp.eq.s32.totalorder %s9, 0
    %p113 = por %p111, %p112
    %p114 = scmp.ne.s32.totalorder %s103, %s106
    %p115 = scmp.eq.s32.totalorder %s14, 1
    %p116 = por %p114, %p115
    %p117 = scmp.ne.s32.totalorder %s106, %s107
    %p118 = scmp.eq.s32.totalorder %s14, 0
    %p119 = por %p117, %p118
    %p120 = scmp.ne.s32.totalorder %s106, %s107
    %p121 = scmp.eq.s32.totalorder %s15, 1
    %p122 = por %p120, %p121
    %p124 = scmp.ne.s32.totalorder %s107, %s123
    %p125 = scmp.eq.s32.totalorder %s15, 0
    %p126 = por %p124, %p125
    %p127 = scmp.le.s32.totalorder 1, %s9
    %p128 = scmp.lt.s32.totalorder %s9, 3
    %p129 = pnand %p127, %p128
    %p130 = pneg %p129
    // Predicated region
    $region9: #{downsample_conv.3} parent=5 // pred_check
      _
    $region10: #{downsample_conv.3} parent=5 // pred_check_branch
      %132 = sbr.rel (%p129) target = $region12
    $region11: #{downsample_conv.3} parent=5 // pred_region
      %s133 = ssub.s32 %s9, 1
      // Predicated region
      $region13: #{downsample_conv.3} parent=11 // pred_check
        %p134 = pneg %p70
      $region14: #{downsample_conv.3} parent=11 // pred_check_branch
        %136 = sbr.rel (%p134) target = $region16
      $region15: #{downsample_conv.3} parent=11 // pred_region
        _
      $region16: #{downsample_conv.3} parent=11 // pred_fallthru
        _
      // Predicated region
      $region17: #{downsample_conv.3} parent=11 // pred_check
        %p137 = pneg %p91
      $region18: #{downsample_conv.3} parent=11 // pred_check_branch
        %139 = sbr.rel (%p137) target = $region20
      $region19: #{downsample_conv.3} parent=11 // pred_region
        _
      $region20: #{downsample_conv.3} parent=11 // pred_fallthru
        _
    $region12: #{downsample_conv.3} parent=5 // pred_fallthru
      _
    %p140 = scmp.lt.s32.totalorder %s9, 2
    // Predicated region
    $region21: #{downsample_conv.3} parent=5 // pred_check
      %p141 = pneg %p140
    $region22: #{downsample_conv.3} parent=5 // pred_check_branch
      %143 = sbr.rel (%p141) target = $region24
    $region23: #{downsample_conv.3} parent=5 // pred_region
      // Predicated region
      $region25: #{downsample_conv.3} parent=23 // pred_check
        %p144 = pneg %p43
      $region26: #{downsample_conv.3} parent=23 // pred_check_branch
        %146 = sbr.rel (%p144) target = $region28
      $region27: #{downsample_conv.3} parent=23 // pred_region
        %p147 = scmp.lt.s32.totalorder %s16, 1
        %s148 = scalar_select %p147, %s16, 1
        %p149 = scmp.lt.s32.totalorder %s17, 0
        %s150 = scalar_select %p149, %s17, 0
        %s151 = smul.addr %s148, 16
        %s152 = sadd.s32 %s150, %s151
        %s153 = smul.addr %s152, 4
        %s154 = scalar_lea.vmem %s0, %s153
      $region28: #{downsample_conv.3} parent=23 // pred_fallthru
        _
    $region24: #{downsample_conv.3} parent=5 // pred_fallthru
      _
    %p155 = scmp.le.s32.totalorder 1, %s9
    %p156 = scmp.lt.s32.totalorder %s9, 3
    %p157 = pnand %p155, %p156
    %p158 = pneg %p157
    // Predicated region
    $region29: #{downsample_conv.3} parent=5 // pred_check
      _
    $region30: #{downsample_conv.3} parent=5 // pred_check_branch
      %160 = sbr.rel (%p157) target = $region32
    $region31: #{downsample_conv.3} parent=5 // pred_region
      %s161 = ssub.s32 %s9, 1
      %p162 = scmp.lt.s32.totalorder %s18, 1
      %s163 = scalar_select %p162, %s18, 1
      %p164 = scmp.lt.s32.totalorder %s19, 0
      %s165 = scalar_select %p164, %s19, 0
      %s166 = smul.addr %s163, 16
      %s167 = sadd.s32 %s165, %s166
      %s168 = smul.addr %s167, 4
      %s169 = scalar_lea.vmem %s0, %s168
      %p170 = pneg %p49
      %p171 = pneg %p46
      %p172 = pneg %p70
      %p173 = pneg %p67
      %p174 = pneg %p91
      %p175 = pneg %p88
      %p176 = pneg %p119
      %p177 = pneg %p116
      %p178 = scmp.lt.s32.totalorder %s18, 1
      %s179 = scalar_select %p178, %s18, 1
      %p180 = scmp.lt.s32.totalorder %s19, 0
      %s181 = scalar_select %p180, %s19, 0
      %s182 = sadd.s32 %s181, %s179
      %s183 = smul.addr %s182, 8
      %s184 = scalar_lea.vmem %s3, %s183
      %p185 = scmp.lt.s32.totalorder %s18, 1
      %s186 = scalar_select %p185, %s18, 1
      %p187 = scmp.lt.s32.totalorder %s19, 0
      %s188 = scalar_select %p187, %s19, 0
      %s189 = smul.addr %s186, 16
      %s190 = sadd.s32 %s188, %s189
      %s191 = smul.addr %s190, 4
      %s192 = scalar_lea.vmem %s0, %s191
      %p193 = scmp.lt.s32.totalorder %s18, 1
      %s194 = scalar_select %p193, %s18, 1
      %p195 = scmp.lt.s32.totalorder %s19, 0
      %s196 = scalar_select %p195, %s19, 0
      %s197 = sadd.s32 %s196, %s194
      %s198 = smul.addr %s197, 8
      %s199 = scalar_lea.vmem %s3, %s198
      %v200 = vld [vmem:[%s192] sm:$0xf]
      %v201 = vunpack.c.l.bf16 %v200
      %v202 = vld [vmem:[%s1] sm:$0xff]
      %204 = vset.pattern.permute.xlu0 0
      %205 = vperm.xlu0 %204, %v202
      %v206 = vpop.permute.xlu0 %205
      %v208 = vmul.f32 %v201, %v206
      %v209 = vld [vmem:[%s2] sm:$0xff]
      %211 = vset.pattern.permute.xlu0 0
      %212 = vperm.xlu0 %211, %v209
      %v213 = vpop.permute.xlu0 %212
      %v215 = vadd.f32 %v208, %v213
      %vm216 = vcmp.ge.f32.partialorder %v215, 0.0
      %v217 = vmul.f32 %v215, 0.2
      %v218 = vsel %vm216, %v215, %v217
      %vm219 = vcmask 523264
      %220 = vst.msk [vmem:[%s199] sm:$0xff] %vm219, %v218
      %p221 = scmp.lt.s32.totalorder %s18, 1
      %s222 = scalar_select %p221, %s18, 1
      %p223 = scmp.lt.s32.totalorder %s19, 0
      %s224 = scalar_select %p223, %s19, 0
      %s225 = sadd.s32 %s224, %s222
      %s226 = smul.addr %s225, 8
      %s227 = scalar_lea.vmem %s3, %s226
      // Predicated region
      $region33: #{downsample_conv.3} parent=31 // pred_check
        %p228 = pneg %p116
      $region34: #{downsample_conv.3} parent=31 // pred_check_branch
        %230 = sbr.rel (%p228) target = $region36
      $region35: #{downsample_conv.3} parent=31 // pred_region
        _
      $region36: #{downsample_conv.3} parent=31 // pred_fallthru
        _
    $region32: #{downsample_conv.3} parent=5 // pred_fallthru
      _
    %p231 = scmp.le.s32.totalorder 2, %s9
    // Predicated region
    $region37: #{downsample_conv.3} parent=5 // pred_check
      %p232 = pneg %p231
    $region38: #{downsample_conv.3} parent=5 // pred_check_branch
      %234 = sbr.rel (%p232) target = $region40
    $region39: #{downsample_conv.3} parent=5 // pred_region
      %s235 = ssub.s32 %s9, 2
      // Predicated region
      $region41: #{downsample_conv.3} parent=39 // pred_check
        %p236 = pneg %p122
      $region42: #{downsample_conv.3} parent=39 // pred_check_branch
        %238 = sbr.rel (%p236) target = $region44
      $region43: #{downsample_conv.3} parent=39 // pred_region
        %p239 = scmp.lt.s32.totalorder %s20, 1
        %s240 = scalar_select %p239, %s20, 1
        %p241 = scmp.lt.s32.totalorder %s21, 0
        %s242 = scalar_select %p241, %s21, 0
        %s243 = sadd.s32 %s242, %s240
        %s244 = smul.addr %s243, 8
        %s245 = scalar_lea.vmem %s3, %s244
      $region44: #{downsample_conv.3} parent=39 // pred_fallthru
        _
    $region40: #{downsample_conv.3} parent=5 // pred_fallthru
      _
  $region6: #{downsample_conv.3} parent=0 // loop_footer
    %s13 = sadd.s32 1, %s9
  $region7: #{downsample_conv.3} parent=0 // loop_footer_branch
    %8 = sbr.rel target = $region3
  $region8: #{downsample_conv.3} parent=0 // loop_exit
    _

// kernel: downsample_conv.2
$region0: #{downsample_conv.2}
  #allocation0 [shape = 'u32[]', space=smem, size = 0x4, offset = 0x4, fixed_abs, tag = 'smem constant byte address 0x4 - core index']
  #allocation1 [shape = 'u32[144,128]{1,0:T(1,128)}', space=vmem, size = 0x12000, scoped, tag = 'internal scratch']
  %s0 = inlined_call_operand.vmem [shape: bf16[2,9,9,128], index: 0, kind: input, shape index: {}]
  %s1 = inlined_call_operand.vmem [shape: bf16[4,128,128], index: 1, kind: input, shape index: {}]
  %s2 = inlined_call_operand.vmem [shape: bf16[2,128,64], index: 2, kind: output, shape index: {0}]
  %s3 = inlined_call_operand.vmem [shape: f32[2,2,128], index: 3, kind: output, shape index: {1}]
  %4 = xla_tuple %s2, %s3
  %s5 = sld [smem:[#allocation0]]
  $region49: #{downsample_conv.2} parent=0
    _
  %s7 = ssub.s32 1, %s5
  %s8 = scalar_select 0, %s7, %s5
  loop: start=0, step=1, limit=4
  $region2: #{downsample_conv.2} parent=0 // loop_pre_header
    _
  $region3: #{downsample_conv.2} parent=0 // loop_header
    %s10 = sphi 0, %s14
    %p11 = scmp.ge.s32.totalorder %s10, 4
    %s17 = sphi 0, %s29
    %s18 = sphi 0, %s25
    %s19 = sphi 0, %s17
    %s20 = sphi 0, %s18
    %s21 = sphi 0, %s19
    %s22 = sphi 0, %s20
    %s32 = sphi 0, %s34
    %s35 = sphi 0, %s32
    %s36 = sphi 0, %s35
    %s52 = sphi 0, %s36
    %s56 = sphi 0, %s56
    %s58 = sphi 0, %s56
    %s59 = sphi 0, %s58
    %s73 = sphi 0, %s59
    %s81 = sphi 0, %s83
    %s84 = sphi 0, %s81
    %s85 = sphi 0, %s84
    %s101 = sphi 0, %s85
    %s109 = sphi 0, %s111
    %s112 = sphi 0, %s109
    %s113 = sphi 0, %s112
    %s129 = sphi 0, %s113
  $region4: #{downsample_conv.2} parent=0 // loop_header_branch
    %13 = sbr.rel (%p11) target = $region8
  $region5: #{downsample_conv.2} parent=0 // loop_body
    %s15 = ssub.s32 %s10, 1
    %s16 = ssub.s32 %s10, 2
    %s23 = sadd.s32 1, %s18
    %p24 = scmp.ge.s32.totalorder %s23, 1
    %s25 = scalar_select %p24, 0, %s23
    %s26 = sadd.s32 1, %s17
    %s27 = scalar_select %p24, %s26, %s17
    %p28 = scmp.ge.s32.totalorder %s27, 2
    %s29 = scalar_select %p28, 0, %s27
    %s30 = ssub.s32 %s17, %s29
    %p31 = scmp.eq.s32.totalorder %s30, 0
    %s33 = sadd.s32 %s32, 1
    %s34 = scalar_select %p31, %s32, %s33
    %p37 = pneg %p31
    %p38 = scmp.eq.s32.totalorder %s10, 1
    %p39 = por %p37, %p38
    %p40 = scmp.ne.s32.totalorder %s32, %s35
    %p41 = scmp.eq.s32.totalorder %s10, 0
    %p42 = por %p40, %p41
    %p43 = scmp.ne.s32.totalorder %s32, %s35
    %p44 = scmp.eq.s32.totalorder %s15, 1
    %p45 = por %p43, %p44
    %p46 = scmp.ne.s32.totalorder %s35, %s36
    %p47 = scmp.eq.s32.totalorder %s15, 0
    %p48 = por %p46, %p47
    %p49 = scmp.ne.s32.totalorder %s35, %s36
    %p50 = scmp.eq.s32.totalorder %s16, 1
    %p51 = por %p49, %p50
    %p53 = scmp.ne.s32.totalorder %s36, %s52
    %p54 = scmp.eq.s32.totalorder %s16, 0
    %p55 = por %p53, %p54
    %s57 = sadd.s32 %s56, 1
    %p60 = scmp.eq.s32.totalorder %s10, 1
    %p61 = scmp.ne.s32.totalorder %s56, %s58
    %p62 = scmp.eq.s32.totalorder %s10, 0
    %p63 = por %p61, %p62
    %p64 = scmp.ne.s32.totalorder %s56, %s58
    %p65 = scmp.eq.s32.totalorder %s15, 1
    %p66 = por %p64, %p65
    %p67 = scmp.ne.s32.totalorder %s58, %s59
    %p68 = scmp.eq.s32.totalorder %s15, 0
    %p69 = por %p67, %p68
    %p70 = scmp.ne.s32.totalorder %s58, %s59
    %p71 = scmp.eq.s32.totalorder %s16, 1
    %p72 = por %p70, %p71
    %p74 = scmp.ne.s32.totalorder %s59, %s73
    %p75 = scmp.eq.s32.totalorder %s16, 0
    %p76 = por %p74, %p75
    %s77 = ssub.s32 %s17, %s29
    %s78 = ssub.s32 %s18, %s25
    %s79 = sor.u32 %s77, %s78
    %p80 = scmp.eq.s32.totalorder %s79, 0
    %s82 = sadd.s32 %s81, 1
    %s83 = scalar_select %p80, %s81, %s82
    %p86 = pneg %p80
    %p87 = scmp.eq.s32.totalorder %s10, 1
    %p88 = por %p86, %p87
    %p89 = scmp.ne.s32.totalorder %s81, %s84
    %p90 = scmp.eq.s32.totalorder %s10, 0
    %p91 = por %p89, %p90
    %p92 = scmp.ne.s32.totalorder %s81, %s84
    %p93 = scmp.eq.s32.totalorder %s15, 1
    %p94 = por %p92, %p93
    %p95 = scmp.ne.s32.totalorder %s84, %s85
    %p96 = scmp.eq.s32.totalorder %s15, 0
    %p97 = por %p95, %p96
    %p98 = scmp.ne.s32.totalorder %s84, %s85
    %p99 = scmp.eq.s32.totalorder %s16, 1
    %p100 = por %p98, %p99
    %p102 = scmp.ne.s32.totalorder %s85, %s101
    %p103 = scmp.eq.s32.totalorder %s16, 0
    %p104 = por %p102, %p103
    %s105 = sadd.s32 %s17, %s18
    %s106 = sadd.s32 %s29, %s25
    %s107 = ssub.s32 %s105, %s106
    %p108 = scmp.eq.s32.totalorder %s107, 0
    %s110 = sadd.s32 %s109, 1
    %s111 = scalar_select %p108, %s109, %s110
    %p114 = pneg %p108
    %p115 = scmp.eq.s32.totalorder %s10, 1
    %p116 = por %p114, %p115
    %p117 = scmp.ne.s32.totalorder %s109, %s112
    %p118 = scmp.eq.s32.totalorder %s10, 0
    %p119 = por %p117, %p118
    %p120 = scmp.ne.s32.totalorder %s109, %s112
    %p121 = scmp.eq.s32.totalorder %s15, 1
    %p122 = por %p120, %p121
    %p123 = scmp.ne.s32.totalorder %s112, %s113
    %p124 = scmp.eq.s32.totalorder %s15, 0
    %p125 = por %p123, %p124
    %p126 = scmp.ne.s32.totalorder %s112, %s113
    %p127 = scmp.eq.s32.totalorder %s16, 1
    %p128 = por %p126, %p127
    %p130 = scmp.ne.s32.totalorder %s113, %s129
    %p131 = scmp.eq.s32.totalorder %s16, 0
    %p132 = por %p130, %p131
    %p133 = scmp.le.s32.totalorder 1, %s10
    %p134 = scmp.lt.s32.totalorder %s10, 3
    %p135 = pnand %p133, %p134
    %p136 = pneg %p135
    // Predicated region
    $region9: #{downsample_conv.2} parent=5 // pred_check
      _
    $region10: #{downsample_conv.2} parent=5 // pred_check_branch
      %138 = sbr.rel (%p135) target = $region12
    $region11: #{downsample_conv.2} parent=5 // pred_region
      %s139 = ssub.s32 %s10, 1
      // Predicated region
      $region13: #{downsample_conv.2} parent=11 // pred_check
        %p140 = pneg %p69
      $region14: #{downsample_conv.2} parent=11 // pred_check_branch
        %142 = sbr.rel (%p140) target = $region16
      $region15: #{downsample_conv.2} parent=11 // pred_region
        _
      $region16: #{downsample_conv.2} parent=11 // pred_fallthru
        _
    $region12: #{downsample_conv.2} parent=5 // pred_fallthru
      _
    %p143 = scmp.lt.s32.totalorder %s10, 2
    // Predicated region
    $region17: #{downsample_conv.2} parent=5 // pred_check
      %p144 = pneg %p143
    $region18: #{downsample_conv.2} parent=5 // pred_check_branch
      %146 = sbr.rel (%p144) target = $region20
    $region19: #{downsample_conv.2} parent=5 // pred_region
      // Predicated region
      $region21: #{downsample_conv.2} parent=19 // pred_check
        %p147 = pneg %p42
      $region22: #{downsample_conv.2} parent=19 // pred_check_branch
        %149 = sbr.rel (%p147) target = $region24
      $region23: #{downsample_conv.2} parent=19 // pred_region
        %p150 = scmp.lt.s32.totalorder %s17, 1
        %s151 = scalar_select %p150, %s17, 1
        %s152 = smul.addr %s151, 18
        %s153 = smul.addr %s152, 4
        %s154 = scalar_lea.vmem %s0, %s153
      $region24: #{downsample_conv.2} parent=19 // pred_fallthru
        _
    $region20: #{downsample_conv.2} parent=5 // pred_fallthru
      _
    %p155 = scmp.le.s32.totalorder 1, %s10
    %p156 = scmp.lt.s32.totalorder %s10, 3
    %p157 = pnand %p155, %p156
    %p158 = pneg %p157
    // Predicated region
    $region25: #{downsample_conv.2} parent=5 // pred_check
      _
    $region26: #{downsample_conv.2} parent=5 // pred_check_branch
      %160 = sbr.rel (%p157) target = $region28
    $region27: #{downsample_conv.2} parent=5 // pred_region
      %s161 = ssub.s32 %s10, 1
      %p162 = scmp.lt.s32.totalorder %s19, 1
      %s163 = scalar_select %p162, %s19, 1
      %s164 = smul.addr %s163, 18
      %s165 = smul.addr %s164, 4
      %s166 = scalar_lea.vmem %s0, %s165
      %p167 = pneg %p48
      %p168 = pneg %p45
      %p169 = pneg %p69
      %p170 = pneg %p66
      %p171 = pneg %p97
      %p172 = pneg %p94
      %p173 = scmp.lt.s32.totalorder %s19, 1
      %s174 = scalar_select %p173, %s19, 1
      %p175 = scmp.lt.s32.totalorder %s20, 0
      %s176 = scalar_select %p175, %s20, 0
      %s177 = smul.addr %s174, 16
      %s178 = sadd.s32 %s176, %s177
      %s179 = smul.addr %s178, 4
      %s180 = scalar_lea.vmem %s2, %s179
      %p181 = pneg %p125
      %p182 = pneg %p122
      %s183 = sadd.s32 %s19, %s20
      %p184 = scmp.lt.s32.totalorder %s183, 1
      %s185 = scalar_select %p184, %s183, 1
      %s186 = smul.addr %s185, 2
      %s187 = scalar_lea.vmem %s3, %s186
      %p188 = scmp.lt.s32.totalorder %s19, 1
      %s189 = scalar_select %p188, %s19, 1
      %s190 = smul.addr %s189, 18
      %s191 = smul.addr %s190, 4
      %s192 = scalar_lea.vmem %s0, %s191
      %p193 = scmp.lt.s32.totalorder %s19, 1
      %s194 = scalar_select %p193, %s19, 1
      %p195 = scmp.lt.s32.totalorder %s20, 0
      %s196 = scalar_select %p195, %s20, 0
      %s197 = smul.addr %s194, 16
      %s198 = sadd.s32 %s196, %s197
      %s199 = smul.addr %s198, 4
      %s200 = scalar_lea.vmem %s2, %s199
      %s201 = sadd.s32 %s19, %s20
      %p202 = scmp.lt.s32.totalorder %s201, 1
      %s203 = scalar_select %p202, %s201, 1
      %s204 = smul.addr %s203, 2
      %s205 = scalar_lea.vmem %s3, %s204
      %s206 = sadd.s32 %s19, %s20
      %s208 = smul.u32 %s20, 8
      %s209 = smul.u32 %s208, 2
      %s210 = smul.addr %s209, 4
      %s211 = scalar_lea.vmem %s192, %s210
      %v212 = vld [vmem:[%s211] sm:$0xf]
      %v213 = vld [vmem:[%s211 + $0x8] sm:$0xf]
      %v214 = vld [vmem:[%s211 + $0x10] sm:$0xf]
      %v215 = vld [vmem:[%s211 + $0x18] sm:$0xf]
      %v216 = vld [vmem:[%s211 + $0x20] sm:$0xf]
      %v217 = vld [vmem:[%s211 + $0x28] sm:$0xf]
      %v218 = vld [vmem:[%s211 + $0x30] sm:$0xf]
      %v219 = vld [vmem:[%s211 + $0x38] sm:$0xf]
      %v220 = vld [vmem:[%s1] sm:$0xf]
      %v221 = vld [vmem:[%s1 + $0x4] sm:$0xf]
      %v222 = vld [vmem:[%s1 + $0x8] sm:$0xf]
      %v223 = vld [vmem:[%s1 + $0xc] sm:$0xf]
      %v224 = vld [vmem:[%s1 + $0x10] sm:$0xf]
      %v225 = vld [vmem:[%s1 + $0x14] sm:$0xf]
      %v226 = vld [vmem:[%s1 + $0x18] sm:$0xf]
      %v227 = vld [vmem:[%s1 + $0x1c] sm:$0xf]
      %v228 = vld [vmem:[%s1 + $0x20] sm:$0xf]
      %v229 = vld [vmem:[%s1 + $0x24] sm:$0xf]
      %v230 = vld [vmem:[%s1 + $0x28] sm:$0xf]
      %v231 = vld [vmem:[%s1 + $0x2c] sm:$0xf]
      %v232 = vld [vmem:[%s1 + $0x30] sm:$0xf]
      %v233 = vld [vmem:[%s1 + $0x34] sm:$0xf]
      %v234 = vld [vmem:[%s1 + $0x38] sm:$0xf]
      %v235 = vld [vmem:[%s1 + $0x3c] sm:$0xf]
      %v236 = vld [vmem:[%s211 + $0x4] sm:$0x1]
      %v237 = vld [vmem:[%s211 + $0xc] sm:$0x1]
      %v238 = vld [vmem:[%s211 + $0x14] sm:$0x1]
      %v239 = vld [vmem:[%s211 + $0x1c] sm:$0x1]
      %v240 = vld [vmem:[%s211 + $0x24] sm:$0x1]
      %v241 = vld [vmem:[%s211 + $0x2c] sm:$0x1]
      %v242 = vld [vmem:[%s211 + $0x34] sm:$0x1]
      %v243 = vld [vmem:[%s211 + $0x3c] sm:$0x1]
      %vm244 = vsmask.f32 3328
      %vm245 = vsmask.f32 7440
      %vm246 = vmor %vm244, %vm245
      %v248 = vshrl.u32 %v212, 16
      %v250 = vrot.slane %v248, 4
      %v251 = vshll.u32 %v212, 16
      %v253 = vrot.slane %v251, 5
      %v254 = vor.u32 %v250, %v253
      %v255 = vrot.slane %v254, 4
      %v257 = vshll.u32 %v236, 16
      %v259 = vrot.slane %v257, 5
      %v260 = vsel %vm246, %v255, %v259
      %v262 = vshrl.u32 %v213, 16
      %v264 = vrot.slane %v262, 4
      %v265 = vshll.u32 %v213, 16
      %v267 = vrot.slane %v265, 5
      %v268 = vor.u32 %v264, %v267
      %v269 = vrot.slane %v268, 4
      %v271 = vshll.u32 %v237, 16
      %v273 = vrot.slane %v271, 5
      %v274 = vsel %vm246, %v269, %v273
      %v276 = vshrl.u32 %v214, 16
      %v278 = vrot.slane %v276, 4
      %v279 = vshll.u32 %v214, 16
      %v281 = vrot.slane %v279, 5
      %v282 = vor.u32 %v278, %v281
      %v283 = vrot.slane %v282, 4
      %v285 = vshll.u32 %v238, 16
      %v287 = vrot.slane %v285, 5
      %v288 = vsel %vm246, %v283, %v287
      %v290 = vshrl.u32 %v215, 16
      %v292 = vrot.slane %v290, 4
      %v293 = vshll.u32 %v215, 16
      %v295 = vrot.slane %v293, 5
      %v296 = vor.u32 %v292, %v295
      %v297 = vrot.slane %v296, 4
      %v299 = vshll.u32 %v239, 16
      %v301 = vrot.slane %v299, 5
      %v302 = vsel %vm246, %v297, %v301
      %v304 = vshrl.u32 %v216, 16
      %v306 = vrot.slane %v304, 4
      %v307 = vshll.u32 %v216, 16
      %v309 = vrot.slane %v307, 5
      %v310 = vor.u32 %v306, %v309
      %v311 = vrot.slane %v310, 4
      %v313 = vshll.u32 %v240, 16
      %v315 = vrot.slane %v313, 5
      %v316 = vsel %vm246, %v311, %v315
      %v318 = vshrl.u32 %v217, 16
      %v320 = vrot.slane %v318, 4
      %v321 = vshll.u32 %v217, 16
      %v323 = vrot.slane %v321, 5
      %v324 = vor.u32 %v320, %v323
      %v325 = vrot.slane %v324, 4
      %v327 = vshll.u32 %v241, 16
      %v329 = vrot.slane %v327, 5
      %v330 = vsel %vm246, %v325, %v329
      %v332 = vshrl.u32 %v218, 16
      %v334 = vrot.slane %v332, 4
      %v335 = vshll.u32 %v218, 16
      %v337 = vrot.slane %v335, 5
      %v338 = vor.u32 %v334, %v337
      %v339 = vrot.slane %v338, 4
      %v341 = vshll.u32 %v242, 16
      %v343 = vrot.slane %v341, 5
      %v344 = vsel %vm246, %v339, %v343
      %v346 = vshrl.u32 %v219, 16
      %v348 = vrot.slane %v346, 4
      %v349 = vshll.u32 %v219, 16
      %v351 = vrot.slane %v349, 5
      %v352 = vor.u32 %v348, %v351
      %v353 = vrot.slane %v352, 4
      %v355 = vshll.u32 %v243, 16
      %v357 = vrot.slane %v355, 5
      %v358 = vsel %vm246, %v353, %v357
      %s359 = scalar_lea.vmem %s1, 64
      %v360 = vld [vmem:[%s359] sm:$0xf]
      %v361 = vld [vmem:[%s359 + $0x4] sm:$0xf]
      %v362 = vld [vmem:[%s359 + $0x8] sm:$0xf]
      %v363 = vld [vmem:[%s359 + $0xc] sm:$0xf]
      %v364 = vld [vmem:[%s359 + $0x10] sm:$0xf]
      %v365 = vld [vmem:[%s359 + $0x14] sm:$0xf]
      %v366 = vld [vmem:[%s359 + $0x18] sm:$0xf]
      %v367 = vld [vmem:[%s359 + $0x1c] sm:$0xf]
      %v368 = vld [vmem:[%s359 + $0x20] sm:$0xf]
      %v369 = vld [vmem:[%s359 + $0x24] sm:$0xf]
      %v370 = vld [vmem:[%s359 + $0x28] sm:$0xf]
      %v371 = vld [vmem:[%s359 + $0x2c] sm:$0xf]
      %v372 = vld [vmem:[%s359 + $0x30] sm:$0xf]
      %v373 = vld [vmem:[%s359 + $0x34] sm:$0xf]
      %v374 = vld [vmem:[%s359 + $0x38] sm:$0xf]
      %v375 = vld [vmem:[%s359 + $0x3c] sm:$0xf]
      %v376 = vunpack.c.l.b16 %v260
      %v377 = vunpack.c.l.b16 %v274
      %v378 = vunpack.c.l.b16 %v288
      %v379 = vunpack.c.l.b16 %v302
      %v380 = vunpack.c.l.b16 %v316
      %v381 = vunpack.c.l.b16 %v330
      %v382 = vunpack.c.l.b16 %v344
      %v383 = vunpack.c.l.b16 %v358
      %v384 = vpack.c.b16 %v377, %v376
      %v385 = vpack.c.b16 %v379, %v378
      %v386 = vpack.c.b16 %v381, %v380
      %v387 = vpack.c.b16 %v383, %v382
      %v408 = vunpack.c.l.b16 %v360
      %v409 = vunpack.c.l.b16 %v361
      %v410 = vunpack.c.l.b16 %v362
      %v411 = vunpack.c.l.b16 %v363
      %v412 = vunpack.c.l.b16 %v364
      %v413 = vunpack.c.l.b16 %v365
      %v414 = vunpack.c.l.b16 %v366
      %v415 = vunpack.c.l.b16 %v367
      %v416 = vunpack.c.l.b16 %v368
      %v417 = vunpack.c.l.b16 %v369
      %v418 = vunpack.c.l.b16 %v370
      %v419 = vunpack.c.l.b16 %v371
      %v420 = vunpack.c.l.b16 %v372
      %v421 = vunpack.c.l.b16 %v373
      %v422 = vunpack.c.l.b16 %v374
      %v423 = vunpack.c.l.b16 %v375
      %v424 = vpack.c.b16 %v409, %v408
      %v425 = vpack.c.b16 %v411, %v410
      %v426 = vpack.c.b16 %v413, %v412
      %v427 = vpack.c.b16 %v415, %v414
      %v428 = vpack.c.b16 %v417, %v416
      %v429 = vpack.c.b16 %v419, %v418
      %v430 = vpack.c.b16 %v421, %v420
      %v431 = vpack.c.b16 %v423, %v422
      %440 = vmatprep.subr.bf16.mxu0 0
      %441 = vmatpush1.bf16.msra.mxu0 %v424
      %442 = vmatprep.subr.bf16.mxu0 0
      %443 = vmatpush1.bf16.msra.mxu0 %v425
      %444 = vmatprep.subr.bf16.mxu0 0
      %445 = vmatpush1.bf16.msra.mxu0 %v426
      %446 = vmatprep.subr.bf16.mxu0 0
      %447 = vmatpush1.bf16.msra.mxu0 %v427
      %448 = vmatprep.subr.bf16.mxu0 0
      %449 = vmatpush1.bf16.msra.mxu0 %v428
      %450 = vmatprep.subr.bf16.mxu0 0
      %451 = vmatpush1.bf16.msra.mxu0 %v429
      %452 = vmatprep.subr.bf16.mxu0 0
      %453 = vmatpush1.bf16.msra.mxu0 %v430
      %454 = vmatprep.subr.bf16.mxu0 0
      %455 = vmatpush1.bf16.msra.mxu0 %v431
      %456 = vmatprep.subr.bf16.mxu0 0
      %457 = vmatpush1.bf16.msra.mxu0 0
      %458 = vmatprep.subr.bf16.mxu0 0
      %459 = vmatpush1.bf16.msra.mxu0 0
      %460 = vmatprep.subr.bf16.mxu0 0
      %461 = vmatpush1.bf16.msra.mxu0 0
      %462 = vmatprep.subr.bf16.mxu0 0
      %463 = vmatpush1.bf16.msra.mxu0 0
      %464 = vmatprep.subr.bf16.mxu0 0
      %465 = vmatpush1.bf16.msra.mxu0 0
      %466 = vmatprep.subr.bf16.mxu0 0
      %467 = vmatpush1.bf16.msra.mxu0 0
      %468 = vmatprep.subr.bf16.mxu0 0
      %469 = vmatpush1.bf16.msra.mxu0 0
      %470 = vmatprep.subr.bf16.mxu0 0
      %471 = vmatpush1.bf16.msra.mxu0 0
      %472 = vmatprep.mubr.bf16.mxu0 0
      %473 = vmatmul.mubr.bf16.gmra.mrb[0].mxu0 %v384
      %v474 = vpop.f32.mrb[0].mxu0
      %v475 = vadd.f32 0.0, %v474
      %v476 = vpop.f32.mrb[0].mxu0
      %v477 = vpop.f32.mrb[0].mxu0
      %v478 = vadd.f32 0.0, %v477
      %v479 = vpop.f32.mrb[0].mxu0
      %480 = vmatprep.mubr.bf16.mxu0 0
      %481 = vmatmul.mubr.bf16.gmra.mrb[0].mxu0 %v385
      %v482 = vpop.f32.mrb[0].mxu0
      %v483 = vadd.f32 0.0, %v482
      %v484 = vpop.f32.mrb[0].mxu0
      %v485 = vpop.f32.mrb[0].mxu0
      %v486 = vadd.f32 0.0, %v485
      %v487 = vpop.f32.mrb[0].mxu0
      %488 = vmatprep.mubr.bf16.mxu0 0
      %489 = vmatmul.mubr.bf16.gmra.mrb[0].mxu0 %v386
      %v490 = vpop.f32.mrb[0].mxu0
      %v491 = vadd.f32 0.0, %v490
      %v492 = vpop.f32.mrb[0].mxu0
      %v493 = vpop.f32.mrb[0].mxu0
      %v494 = vadd.f32 0.0, %v493
      %v495 = vpop.f32.mrb[0].mxu0
      %496 = vmatprep.mubr.bf16.mxu0 0
      %497 = vmatmul.mubr.bf16.gmra.mrb[0].mxu0 %v387
      %v498 = vpop.f32.mrb[0].mxu0
      %v499 = vadd.f32 0.0, %v498
      %v500 = vpop.f32.mrb[0].mxu0
      %v501 = vpop.f32.mrb[0].mxu0
      %v502 = vadd.f32 0.0, %v501
      %v503 = vpop.f32.mrb[0].mxu0
      %504 = vdwg.mxu0
      %v513 = vunpack.c.l.b16 %v212
      %v514 = vunpack.c.l.b16 %v213
      %v515 = vunpack.c.l.b16 %v214
      %v516 = vunpack.c.l.b16 %v215
      %v517 = vunpack.c.l.b16 %v216
      %v518 = vunpack.c.l.b16 %v217
      %v519 = vunpack.c.l.b16 %v218
      %v520 = vunpack.c.l.b16 %v219
      %v521 = vpack.c.b16 %v514, %v513
      %v522 = vpack.c.b16 %v516, %v515
      %v523 = vpack.c.b16 %v518, %v517
      %v524 = vpack.c.b16 %v520, %v519
      %v545 = vunpack.c.l.b16 %v220
      %v546 = vunpack.c.l.b16 %v221
      %v547 = vunpack.c.l.b16 %v222
      %v548 = vunpack.c.l.b16 %v223
      %v549 = vunpack.c.l.b16 %v224
      %v550 = vunpack.c.l.b16 %v225
      %v551 = vunpack.c.l.b16 %v226
      %v552 = vunpack.c.l.b16 %v227
      %v553 = vunpack.c.l.b16 %v228
      %v554 = vunpack.c.l.b16 %v229
      %v555 = vunpack.c.l.b16 %v230
      %v556 = vunpack.c.l.b16 %v231
      %v557 = vunpack.c.l.b16 %v232
      %v558 = vunpack.c.l.b16 %v233
      %v559 = vunpack.c.l.b16 %v234
      %v560 = vunpack.c.l.b16 %v235
      %v561 = vpack.c.b16 %v546, %v545
      %v562 = vpack.c.b16 %v548, %v547
      %v563 = vpack.c.b16 %v550, %v549
      %v564 = vpack.c.b16 %v552, %v551
      %v565 = vpack.c.b16 %v554, %v553
      %v566 = vpack.c.b16 %v556, %v555
      %v567 = vpack.c.b16 %v558, %v557
      %v568 = vpack.c.b16 %v560, %v559
      %577 = vmatprep.subr.bf16.mxu0 0
      %578 = vmatpush1.bf16.msra.mxu0 %v561
      %579 = vmatprep.subr.bf16.mxu0 0
      %580 = vmatpush1.bf16.msra.mxu0 %v562
      %581 = vmatprep.subr.bf16.mxu0 0
      %582 = vmatpush1.bf16.msra.mxu0 %v563
      %583 = vmatprep.subr.bf16.mxu0 0
      %584 = vmatpush1.bf16.msra.mxu0 %v564
      %585 = vmatprep.subr.bf16.mxu0 0
      %586 = vmatpush1.bf16.msra.mxu0 %v565
      %587 = vmatprep.subr.bf16.mxu0 0
      %588 = vmatpush1.bf16.msra.mxu0 %v566
      %589 = vmatprep.subr.bf16.mxu0 0
      %590 = vmatpush1.bf16.msra.mxu0 %v567
      %591 = vmatprep.subr.bf16.mxu0 0
      %592 = vmatpush1.bf16.msra.mxu0 %v568
      %593 = vmatprep.subr.bf16.mxu0 0
      %594 = vmatpush1.bf16.msra.mxu0 0
      %595 = vmatprep.subr.bf16.mxu0 0
      %596 = vmatpush1.bf16.msra.mxu0 0
      %597 = vmatprep.subr.bf16.mxu0 0
      %598 = vmatpush1.bf16.msra.mxu0 0
      %599 = vmatprep.subr.bf16.mxu0 0
      %600 = vmatpush1.bf16.msra.mxu0 0
      %601 = vmatprep.subr.bf16.mxu0 0
      %602 = vmatpush1.bf16.msra.mxu0 0
      %603 = vmatprep.subr.bf16.mxu0 0
      %604 = vmatpush1.bf16.msra.mxu0 0
      %605 = vmatprep.subr.bf16.mxu0 0
      %606 = vmatpush1.bf16.msra.mxu0 0
      %607 = vmatprep.subr.bf16.mxu0 0
      %608 = vmatpush1.bf16.msra.mxu0 0
      %609 = vmatprep.mubr.bf16.mxu0 0
      %610 = vmatmul.mubr.bf16.gmra.mrb[0].mxu0 %v521
      %v611 = vpop.f32.mrb[0].mxu0
      %v612 = vadd.f32 %v475, %v611
      %v613 = vpop.f32.mrb[0].mxu0
      %v614 = vpop.f32.mrb[0].mxu0
      %v615 = vadd.f32 %v478, %v614
      %v616 = vpop.f32.mrb[0].mxu0
      %617 = vmatprep.mubr.bf16.mxu0 0
      %618 = vmatmul.mubr.bf16.gmra.mrb[0].mxu0 %v522
      %v619 = vpop.f32.mrb[0].mxu0
      %v620 = vadd.f32 %v483, %v619
      %v621 = vpop.f32.mrb[0].mxu0
      %v622 = vpop.f32.mrb[0].mxu0
      %v623 = vadd.f32 %v486, %v622
      %v624 = vpop.f32.mrb[0].mxu0
      %625 = vmatprep.mubr.bf16.mxu0 0
      %626 = vmatmul.mubr.bf16.gmra.mrb[0].mxu0 %v523
      %v627 = vpop.f32.mrb[0].mxu0
      %v628 = vadd.f32 %v491, %v627
      %v629 = vpop.f32.mrb[0].mxu0
      %v630 = vpop.f32.mrb[0].mxu0
      %v631 = vadd.f32 %v494, %v630
      %v632 = vpop.f32.mrb[0].mxu0
      %633 = vmatprep.mubr.bf16.mxu0 0
      %634 = vmatmul.mubr.bf16.gmra.mrb[0].mxu0 %v524
      %v635 = vpop.f32.mrb[0].mxu0
      %v636 = vadd.f32 %v499, %v635
      %v637 = vpop.f32.mrb[0].mxu0
      %v638 = vpop.f32.mrb[0].mxu0
      %v639 = vadd.f32 %v502, %v638
      %v640 = vpop.f32.mrb[0].mxu0
      %641 = vdwg.mxu0
      %s642 = sadd.s32 %s208, 1
      %s643 = smul.u32 %s642, 2
      %s644 = smul.addr %s643, 4
      %s645 = scalar_lea.vmem %s192, %s644
      %v646 = vld [vmem:[%s645] sm:$0xf]
      %v647 = vld [vmem:[%s645 + $0x8] sm:$0xf]
      %v648 = vld [vmem:[%s645 + $0x10] sm:$0xf]
      %v649 = vld [vmem:[%s645 + $0x18] sm:$0xf]
      %v650 = vld [vmem:[%s645 + $0x20] sm:$0xf]
      %v651 = vld [vmem:[%s645 + $0x28] sm:$0xf]
      %v652 = vld [vmem:[%s645 + $0x30] sm:$0xf]
      %v653 = vld [vmem:[%s645 + $0x38] sm:$0xf]
      %s654 = scalar_lea.vmem %s1, 128
      %v655 = vld [vmem:[%s654] sm:$0xf]
      %v656 = vld [vmem:[%s654 + $0x4] sm:$0xf]
      %v657 = vld [vmem:[%s654 + $0x8] sm:$0xf]
      %v658 = vld [vmem:[%s654 + $0xc] sm:$0xf]
      %v659 = vld [vmem:[%s654 + $0x10] sm:$0xf]
      %v660 = vld [vmem:[%s654 + $0x14] sm:$0xf]
      %v661 = vld [vmem:[%s654 + $0x18] sm:$0xf]
      %v662 = vld [vmem:[%s654 + $0x1c] sm:$0xf]
      %v663 = vld [vmem:[%s654 + $0x20] sm:$0xf]
      %v664 = vld [vmem:[%s654 + $0x24] sm:$0xf]
      %v665 = vld [vmem:[%s654 + $0x28] sm:$0xf]
      %v666 = vld [vmem:[%s654 + $0x2c] sm:$0xf]
      %v667 = vld [vmem:[%s654 + $0x30] sm:$0xf]
      %v668 = vld [vmem:[%s654 + $0x34] sm:$0xf]
      %v669 = vld [vmem:[%s654 + $0x38] sm:$0xf]
      %v670 = vld [vmem:[%s654 + $0x3c] sm:$0xf]
      %v679 = vunpack.c.l.b16 %v646
      %v680 = vunpack.c.l.b16 %v647
      %v681 = vunpack.c.l.b16 %v648
      %v682 = vunpack.c.l.b16 %v649
      %v683 = vunpack.c.l.b16 %v650
      %v684 = vunpack.c.l.b16 %v651
      %v685 = vunpack.c.l.b16 %v652
      %v686 = vunpack.c.l.b16 %v653
      %v687 = vpack.c.b16 %v680, %v679
      %v688 = vpack.c.b16 %v682, %v681
      %v689 = vpack.c.b16 %v684, %v683
      %v690 = vpack.c.b16 %v686, %v685
      %v711 = vunpack.c.l.b16 %v655
      %v712 = vunpack.c.l.b16 %v656
      %v713 = vunpack.c.l.b16 %v657
      %v714 = vunpack.c.l.b16 %v658
      %v715 = vunpack.c.l.b16 %v659
      %v716 = vunpack.c.l.b16 %v660
      %v717 = vunpack.c.l.b16 %v661
      %v718 = vunpack.c.l.b16 %v662
      %v719 = vunpack.c.l.b16 %v663
      %v720 = vunpack.c.l.b16 %v664
      %v721 = vunpack.c.l.b16 %v665
      %v722 = vunpack.c.l.b16 %v666
      %v723 = vunpack.c.l.b16 %v667
      %v724 = vunpack.c.l.b16 %v668
      %v725 = vunpack.c.l.b16 %v669
      %v726 = vunpack.c.l.b16 %v670
      %v727 = vpack.c.b16 %v712, %v711
      %v728 = vpack.c.b16 %v714, %v713
      %v729 = vpack.c.b16 %v716, %v715
      %v730 = vpack.c.b16 %v718, %v717
      %v731 = vpack.c.b16 %v720, %v719
      %v732 = vpack.c.b16 %v722, %v721
      %v733 = vpack.c.b16 %v724, %v723
      %v734 = vpack.c.b16 %v726, %v725
      %743 = vmatprep.subr.bf16.mxu0 0
      %744 = vmatpush1.bf16.msra.mxu0 %v727
      %745 = vmatprep.subr.bf16.mxu0 0
      %746 = vmatpush1.bf16.msra.mxu0 %v728
      %747 = vmatprep.subr.bf16.mxu0 0
      %748 = vmatpush1.bf16.msra.mxu0 %v729
      %749 = vmatprep.subr.bf16.mxu0 0
      %750 = vmatpush1.bf16.msra.mxu0 %v730
      %751 = vmatprep.subr.bf16.mxu0 0
      %752 = vmatpush1.bf16.msra.mxu0 %v731
      %753 = vmatprep.subr.bf16.mxu0 0
      %754 = vmatpush1.bf16.msra.mxu0 %v732
      %755 = vmatprep.subr.bf16.mxu0 0
      %756 = vmatpush1.bf16.msra.mxu0 %v733
      %757 = vmatprep.subr.bf16.mxu0 0
      %758 = vmatpush1.bf16.msra.mxu0 %v734
      %759 = vmatprep.subr.bf16.mxu0 0
      %760 = vmatpush1.bf16.msra.mxu0 0
      %761 = vmatprep.subr.bf16.mxu0 0
      %762 = vmatpush1.bf16.msra.mxu0 0
      %763 = vmatprep.subr.bf16.mxu0 0
      %764 = vmatpush1.bf16.msra.mxu0 0
      %765 = vmatprep.subr.bf16.mxu0 0
      %766 = vmatpush1.bf16.msra.mxu0 0
      %767 = vmatprep.subr.bf16.mxu0 0
      %768 = vmatpush1.bf16.msra.mxu0 0
      %769 = vmatprep.subr.bf16.mxu0 0
      %770 = vmatpush1.bf16.msra.mxu0 0
      %771 = vmatprep.subr.bf16.mxu0 0
      %772 = vmatpush1.bf16.msra.mxu0 0
      %773 = vmatprep.subr.bf16.mxu0 0
      %774 = vmatpush1.bf16.msra.mxu0 0
      %775 = vmatprep.mubr.bf16.mxu0 0
      %776 = vmatmul.mubr.bf16.gmra.mrb[0].mxu0 %v687
      %v777 = vpop.f32.mrb[0].mxu0
      %v778 = vadd.f32 0.0, %v777
      %v779 = vpop.f32.mrb[0].mxu0
      %v780 = vpop.f32.mrb[0].mxu0
      %v781 = vadd.f32 0.0, %v780
      %v782 = vpop.f32.mrb[0].mxu0
      %783 = vmatprep.mubr.bf16.mxu0 0
      %784 = vmatmul.mubr.bf16.gmra.mrb[0].mxu0 %v688
      %v785 = vpop.f32.mrb[0].mxu0
      %v786 = vadd.f32 0.0, %v785
      %v787 = vpop.f32.mrb[0].mxu0
      %v788 = vpop.f32.mrb[0].mxu0
      %v789 = vadd.f32 0.0, %v788
      %v790 = vpop.f32.mrb[0].mxu0
      %791 = vmatprep.mubr.bf16.mxu0 0
      %792 = vmatmul.mubr.bf16.gmra.mrb[0].mxu0 %v689
      %v793 = vpop.f32.mrb[0].mxu0
      %v794 = vadd.f32 0.0, %v793
      %v795 = vpop.f32.mrb[0].mxu0
      %v796 = vpop.f32.mrb[0].mxu0
      %v797 = vadd.f32 0.0, %v796
      %v798 = vpop.f32.mrb[0].mxu0
      %799 = vmatprep.mubr.bf16.mxu0 0
      %800 = vmatmul.mubr.bf16.gmra.mrb[0].mxu0 %v690
      %v801 = vpop.f32.mrb[0].mxu0
      %v802 = vadd.f32 0.0, %v801
      %v803 = vpop.f32.mrb[0].mxu0
      %v804 = vpop.f32.mrb[0].mxu0
      %v805 = vadd.f32 0.0, %v804
      %v806 = vpop.f32.mrb[0].mxu0
      %807 = vdwg.mxu0
      %v808 = vadd.f32 %v612, %v778
      %v809 = vadd.f32 %v615, %v781
      %v810 = vadd.f32 %v620, %v786
      %v811 = vadd.f32 %v623, %v789
      %v812 = vadd.f32 %v628, %v794
      %v813 = vadd.f32 %v631, %v797
      %v814 = vadd.f32 %v636, %v802
      %v815 = vadd.f32 %v639, %v805
      %v816 = vld [vmem:[%s645] sm:$0xf]
      %v817 = vld [vmem:[%s645 + $0x4] sm:$0x1]
      %v818 = vld [vmem:[%s645 + $0x8] sm:$0xf]
      %v819 = vld [vmem:[%s645 + $0xc] sm:$0x1]
      %v820 = vld [vmem:[%s645 + $0x10] sm:$0xf]
      %v821 = vld [vmem:[%s645 + $0x14] sm:$0x1]
      %v822 = vld [vmem:[%s645 + $0x18] sm:$0xf]
      %v823 = vld [vmem:[%s645 + $0x1c] sm:$0x1]
      %v824 = vld [vmem:[%s645 + $0x20] sm:$0xf]
      %v825 = vld [vmem:[%s645 + $0x24] sm:$0x1]
      %v826 = vld [vmem:[%s645 + $0x28] sm:$0xf]
      %v827 = vld [vmem:[%s645 + $0x2c] sm:$0x1]
      %v828 = vld [vmem:[%s645 + $0x30] sm:$0xf]
      %v829 = vld [vmem:[%s645 + $0x34] sm:$0x1]
      %v830 = vld [vmem:[%s645 + $0x38] sm:$0xf]
      %v831 = vld [vmem:[%s645 + $0x3c] sm:$0x1]
      %v833 = vshrl.u32 %v816, 16
      %v835 = vrot.slane %v833, 4
      %v836 = vshll.u32 %v816, 16
      %v838 = vrot.slane %v836, 5
      %v839 = vor.u32 %v835, %v838
      %v840 = vrot.slane %v839, 4
      %v842 = vshll.u32 %v817, 16
      %v844 = vrot.slane %v842, 5
      %v845 = vsel %vm246, %v840, %v844
      %v847 = vshrl.u32 %v818, 16
      %v849 = vrot.slane %v847, 4
      %v850 = vshll.u32 %v818, 16
      %v852 = vrot.slane %v850, 5
      %v853 = vor.u32 %v849, %v852
      %v854 = vrot.slane %v853, 4
      %v856 = vshll.u32 %v819, 16
      %v858 = vrot.slane %v856, 5
      %v859 = vsel %vm246, %v854, %v858
      %v861 = vshrl.u32 %v820, 16
      %v863 = vrot.slane %v861, 4
      %v864 = vshll.u32 %v820, 16
      %v866 = vrot.slane %v864, 5
      %v867 = vor.u32 %v863, %v866
      %v868 = vrot.slane %v867, 4
      %v870 = vshll.u32 %v821, 16
      %v872 = vrot.slane %v870, 5
      %v873 = vsel %vm246, %v868, %v872
      %v875 = vshrl.u32 %v822, 16
      %v877 = vrot.slane %v875, 4
      %v878 = vshll.u32 %v822, 16
      %v880 = vrot.slane %v878, 5
      %v881 = vor.u32 %v877, %v880
      %v882 = vrot.slane %v881, 4
      %v884 = vshll.u32 %v823, 16
      %v886 = vrot.slane %v884, 5
      %v887 = vsel %vm246, %v882, %v886
      %v889 = vshrl.u32 %v824, 16
      %v891 = vrot.slane %v889, 4
      %v892 = vshll.u32 %v824, 16
      %v894 = vrot.slane %v892, 5
      %v895 = vor.u32 %v891, %v894
      %v896 = vrot.slane %v895, 4
      %v898 = vshll.u32 %v825, 16
      %v900 = vrot.slane %v898, 5
      %v901 = vsel %vm246, %v896, %v900
      %v903 = vshrl.u32 %v826, 16
      %v905 = vrot.slane %v903, 4
      %v906 = vshll.u32 %v826, 16
      %v908 = vrot.slane %v906, 5
      %v909 = vor.u32 %v905, %v908
      %v910 = vrot.slane %v909, 4
      %v912 = vshll.u32 %v827, 16
      %v914 = vrot.slane %v912, 5
      %v915 = vsel %vm246, %v910, %v914
      %v917 = vshrl.u32 %v828, 16
      %v919 = vrot.slane %v917, 4
      %v920 = vshll.u32 %v828, 16
      %v922 = vrot.slane %v920, 5
      %v923 = vor.u32 %v919, %v922
      %v924 = vrot.slane %v923, 4
      %v926 = vshll.u32 %v829, 16
      %v928 = vrot.slane %v926, 5
      %v929 = vsel %vm246, %v924, %v928
      %v931 = vshrl.u32 %v830, 16
      %v933 = vrot.slane %v931, 4
      %v934 = vshll.u32 %v830, 16
      %v936 = vrot.slane %v934, 5
      %v937 = vor.u32 %v933, %v936
      %v938 = vrot.slane %v937, 4
      %v940 = vshll.u32 %v831, 16
      %v942 = vrot.slane %v940, 5
      %v943 = vsel %vm246, %v938, %v942
      %s944 = scalar_lea.vmem %s1, 192
      %v945 = vld [vmem:[%s944] sm:$0xf]
      %v946 = vld [vmem:[%s944 + $0x4] sm:$0xf]
      %v947 = vld [vmem:[%s944 + $0x8] sm:$0xf]
      %v948 = vld [vmem:[%s944 + $0xc] sm:$0xf]
      %v949 = vld [vmem:[%s944 + $0x10] sm:$0xf]
      %v950 = vld [vmem:[%s944 + $0x14] sm:$0xf]
      %v951 = vld [vmem:[%s944 + $0x18] sm:$0xf]
      %v952 = vld [vmem:[%s944 + $0x1c] sm:$0xf]
      %v953 = vld [vmem:[%s944 + $0x20] sm:$0xf]
      %v954 = vld [vmem:[%s944 + $0x24] sm:$0xf]
      %v955 = vld [vmem:[%s944 + $0x28] sm:$0xf]
      %v956 = vld [vmem:[%s944 + $0x2c] sm:$0xf]
      %v957 = vld [vmem:[%s944 + $0x30] sm:$0xf]
      %v958 = vld [vmem:[%s944 + $0x34] sm:$0xf]
      %v959 = vld [vmem:[%s944 + $0x38] sm:$0xf]
      %v960 = vld [vmem:[%s944 + $0x3c] sm:$0xf]
      %v961 = vunpack.c.l.b16 %v845
      %v962 = vunpack.c.l.b16 %v859
      %v963 = vunpack.c.l.b16 %v873
      %v964 = vunpack.c.l.b16 %v887
      %v965 = vunpack.c.l.b16 %v901
      %v966 = vunpack.c.l.b16 %v915
      %v967 = vunpack.c.l.b16 %v929
      %v968 = vunpack.c.l.b16 %v943
      %v969 = vpack.c.b16 %v962, %v961
      %v970 = vpack.c.b16 %v964, %v963
      %v971 = vpack.c.b16 %v966, %v965
      %v972 = vpack.c.b16 %v968, %v967
      %v993 = vunpack.c.l.b16 %v945
      %v994 = vunpack.c.l.b16 %v946
      %v995 = vunpack.c.l.b16 %v947
      %v996 = vunpack.c.l.b16 %v948
      %v997 = vunpack.c.l.b16 %v949
      %v998 = vunpack.c.l.b16 %v950
      %v999 = vunpack.c.l.b16 %v951
      %v1000 = vunpack.c.l.b16 %v952
      %v1001 = vunpack.c.l.b16 %v953
      %v1002 = vunpack.c.l.b16 %v954
      %v1003 = vunpack.c.l.b16 %v955
      %v1004 = vunpack.c.l.b16 %v956
      %v1005 = vunpack.c.l.b16 %v957
      %v1006 = vunpack.c.l.b16 %v958
      %v1007 = vunpack.c.l.b16 %v959
      %v1008 = vunpack.c.l.b16 %v960
      %v1009 = vpack.c.b16 %v994, %v993
      %v1010 = vpack.c.b16 %v996, %v995
      %v1011 = vpack.c.b16 %v998, %v997
      %v1012 = vpack.c.b16 %v1000, %v999
      %v1013 = vpack.c.b16 %v1002, %v1001
      %v1014 = vpack.c.b16 %v1004, %v1003
      %v1015 = vpack.c.b16 %v1006, %v1005
      %v1016 = vpack.c.b16 %v1008, %v1007
      %1025 = vmatprep.subr.bf16.mxu0 0
      %1026 = vmatpush1.bf16.msra.mxu0 %v1009
      %1027 = vmatprep.subr.bf16.mxu0 0
      %1028 = vmatpush1.bf16.msra.mxu0 %v1010
      %1029 = vmatprep.subr.bf16.mxu0 0
      %1030 = vmatpush1.bf16.msra.mxu0 %v1011
      %1031 = vmatprep.subr.bf16.mxu0 0
      %1032 = vmatpush1.bf16.msra.mxu0 %v1012
      %1033 = vmatprep.subr.bf16.mxu0 0
      %1034 = vmatpush1.bf16.msra.mxu0 %v1013
      %1035 = vmatprep.subr.bf16.mxu0 0
      %1036 = vmatpush1.bf16.msra.mxu0 %v1014
      %1037 = vmatprep.subr.bf16.mxu0 0
      %1038 = vmatpush1.bf16.msra.mxu0 %v1015
      %1039 = vmatprep.subr.bf16.mxu0 0
      %1040 = vmatpush1.bf16.msra.mxu0 %v1016
      %1041 = vmatprep.subr.bf16.mxu0 0
      %1042 = vmatpush1.bf16.msra.mxu0 0
      %1043 = vmatprep.subr.bf16.mxu0 0
      %1044 = vmatpush1.bf16.msra.mxu0 0
      %1045 = vmatprep.subr.bf16.mxu0 0
      %1046 = vmatpush1.bf16.msra.mxu0 0
      %1047 = vmatprep.subr.bf16.mxu0 0
      %1048 = vmatpush1.bf16.msra.mxu0 0
      %1049 = vmatprep.subr.bf16.mxu0 0
      %1050 = vmatpush1.bf16.msra.mxu0 0
      %1051 = vmatprep.subr.bf16.mxu0 0
      %1052 = vmatpush1.bf16.msra.mxu0 0
      %1053 = vmatprep.subr.bf16.mxu0 0
      %1054 = vmatpush1.bf16.msra.mxu0 0
      %1055 = vmatprep.subr.bf16.mxu0 0
      %1056 = vmatpush1.bf16.msra.mxu0 0
      %1057 = vmatprep.mubr.bf16.mxu0 0
      %1058 = vmatmul.mubr.bf16.gmra.mrb[0].mxu0 %v969
      %v1059 = vpop.f32.mrb[0].mxu0
      %v1060 = vadd.f32 0.0, %v1059
      %v1061 = vpop.f32.mrb[0].mxu0
      %v1062 = vpop.f32.mrb[0].mxu0
      %v1063 = vadd.f32 0.0, %v1062
      %v1064 = vpop.f32.mrb[0].mxu0
      %1065 = vmatprep.mubr.bf16.mxu0 0
      %1066 = vmatmul.mubr.bf16.gmra.mrb[0].mxu0 %v970
      %v1067 = vpop.f32.mrb[0].mxu0
      %v1068 = vadd.f32 0.0, %v1067
      %v1069 = vpop.f32.mrb[0].mxu0
      %v1070 = vpop.f32.mrb[0].mxu0
      %v1071 = vadd.f32 0.0, %v1070
      %v1072 = vpop.f32.mrb[0].mxu0
      %1073 = vmatprep.mubr.bf16.mxu0 0
      %1074 = vmatmul.mubr.bf16.gmra.mrb[0].mxu0 %v971
      %v1075 = vpop.f32.mrb[0].mxu0
      %v1076 = vadd.f32 0.0, %v1075
      %v1077 = vpop.f32.mrb[0].mxu0
      %v1078 = vpop.f32.mrb[0].mxu0
      %v1079 = vadd.f32 0.0, %v1078
      %v1080 = vpop.f32.mrb[0].mxu0
      %1081 = vmatprep.mubr.bf16.mxu0 0
      %1082 = vmatmul.mubr.bf16.gmra.mrb[0].mxu0 %v972
      %v1083 = vpop.f32.mrb[0].mxu0
      %v1084 = vadd.f32 0.0, %v1083
      %v1085 = vpop.f32.mrb[0].mxu0
      %v1086 = vpop.f32.mrb[0].mxu0
      %v1087 = vadd.f32 0.0, %v1086
      %v1088 = vpop.f32.mrb[0].mxu0
      %1089 = vdwg.mxu0
      %v1090 = vadd.f32 %v808, %v1060
      %v1091 = vadd.f32 %v809, %v1063
      %v1092 = vadd.f32 %v810, %v1068
      %v1093 = vadd.f32 %v811, %v1071
      %v1094 = vadd.f32 %v812, %v1076
      %v1095 = vadd.f32 %v813, %v1079
      %v1096 = vadd.f32 %v814, %v1084
      %v1097 = vadd.f32 %v815, %v1087
      %v1098 = vadd.f32 %v1090, %v1091
      %v1099 = vadd.f32 %v1098, %v1092
      %v1100 = vadd.f32 %v1099, %v1093
      %v1101 = vadd.f32 %v1100, %v1094
      %v1102 = vadd.f32 %v1101, %v1095
      %v1103 = vadd.f32 %v1102, %v1096
      %v1104 = vadd.f32 %v1103, %v1097
      %v1105 = vrot.slane %v1104, 4
      %v1106 = vadd.f32 %v1104, %v1105
      %v1107 = vrot.slane %v1106, 2
      %v1108 = vadd.f32 %v1106, %v1107
      %v1109 = vrot.slane %v1108, 1
      %v1110 = vadd.f32 %v1108, %v1109
      %v1111 = vmul.f32 %v1110, 0.015625
      %v1112 = vsub.f32 %v1090, %v1111
      %v1113 = vsub.f32 %v1091, %v1111
      %v1114 = vsub.f32 %v1092, %v1111
      %v1115 = vsub.f32 %v1093, %v1111
      %v1116 = vsub.f32 %v1094, %v1111
      %v1117 = vsub.f32 %v1095, %v1111
      %v1118 = vsub.f32 %v1096, %v1111
      %v1119 = vsub.f32 %v1097, %v1111
      %v1120 = vmul.f32 %v1112, %v1112
      %v1121 = vmul.f32 %v1113, %v1113
      %v1122 = vmul.f32 %v1114, %v1114
      %v1123 = vmul.f32 %v1115, %v1115
      %v1124 = vmul.f32 %v1116, %v1116
      %v1125 = vmul.f32 %v1117, %v1117
      %v1126 = vmul.f32 %v1118, %v1118
      %v1127 = vmul.f32 %v1119, %v1119
      %v1128 = vadd.f32 %v1120, %v1121
      %v1129 = vadd.f32 %v1128, %v1122
      %v1130 = vadd.f32 %v1129, %v1123
      %v1131 = vadd.f32 %v1130, %v1124
      %v1132 = vadd.f32 %v1131, %v1125
      %v1133 = vadd.f32 %v1132, %v1126
      %v1134 = vadd.f32 %v1133, %v1127
      %v1135 = vrot.slane %v1134, 4
      %v1136 = vadd.f32 %v1134, %v1135
      %v1137 = vrot.slane %v1136, 2
      %v1138 = vadd.f32 %v1136, %v1137
      %v1139 = vrot.slane %v1138, 1
      %v1140 = vadd.f32 %v1138, %v1139
      %vm1141 = vcmask 1040384
      %v1142 = vsel %vm1141, %v1110, %v1140
      %1143 = vst [vmem:[%s205] sm:$0x3] %v1142
      %1144 = vxpose.xlu0.b32.start [1/16] %v1090, 128
      %1145 = vxpose.xlu0.b32.cont [2/16] %v1091, 128
      %1146 = vxpose.xlu0.b32.cont [3/16] %v1092, 128
      %1147 = vxpose.xlu0.b32.cont [4/16] %v1093, 128
      %1148 = vxpose.xlu0.b32.cont [5/16] %v1094, 128
      %1149 = vxpose.xlu0.b32.cont [6/16] %v1095, 128
      %1150 = vxpose.xlu0.b32.cont [7/16] %v1096, 128
      %1151 = vxpose.xlu0.b32.cont [8/16] %v1097, 128
      %1152 = vxpose.xlu0.b32.cont [9/16] 0.0, 128
      %1153 = vxpose.xlu0.b32.cont [10/16] 0.0, 128
      %1154 = vxpose.xlu0.b32.cont [11/16] 0.0, 128
      %1155 = vxpose.xlu0.b32.cont [12/16] 0.0, 128
      %1156 = vxpose.xlu0.b32.cont [13/16] 0.0, 128
      %1157 = vxpose.xlu0.b32.cont [14/16] 0.0, 128
      %1158 = vxpose.xlu0.b32.cont [15/16] 0.0, 128
      %1159 = vxpose.xlu0.b32.end [16/16] 0.0, 128
      %v1160 = vpop.trf.xlu0
      %v1161 = vpop.trf.xlu0
      %v1162 = vpop.trf.xlu0
      %v1163 = vpop.trf.xlu0
      %v1164 = vpop.trf.xlu0
      %v1165 = vpop.trf.xlu0
      %v1166 = vpop.trf.xlu0
      %v1167 = vpop.trf.xlu0
      %v1168 = vpop.trf.xlu0
      %v1169 = vpop.trf.xlu0
      %v1170 = vpop.trf.xlu0
      %v1171 = vpop.trf.xlu0
      %v1172 = vpop.trf.xlu0
      %v1173 = vpop.trf.xlu0
      %v1174 = vpop.trf.xlu0
      %v1175 = vpop.trf.xlu0
      %v1176 = vpack.c.bf16 %v1161, %v1160
      %v1177 = vpack.c.bf16 %v1163, %v1162
      %v1178 = vpack.c.bf16 %v1165, %v1164
      %v1179 = vpack.c.bf16 %v1167, %v1166
      %v1180 = vpack.c.bf16 %v1169, %v1168
      %v1181 = vpack.c.bf16 %v1171, %v1170
      %v1182 = vpack.c.bf16 %v1173, %v1172
      %v1183 = vpack.c.bf16 %v1175, %v1174
      %v1192 = vunpack.c.l.b16 %v1176
      %v1193 = vunpack.c.h.b16 %v1176
      %v1194 = vunpack.c.l.b16 %v1177
      %v1195 = vunpack.c.h.b16 %v1177
      %v1196 = vunpack.c.l.b16 %v1178
      %v1197 = vunpack.c.h.b16 %v1178
      %v1198 = vunpack.c.l.b16 %v1179
      %v1199 = vunpack.c.h.b16 %v1179
      %v1200 = vunpack.c.l.b16 %v1180
      %v1201 = vunpack.c.h.b16 %v1180
      %v1202 = vunpack.c.l.b16 %v1181
      %v1203 = vunpack.c.h.b16 %v1181
      %v1204 = vunpack.c.l.b16 %v1182
      %v1205 = vunpack.c.h.b16 %v1182
      %v1206 = vunpack.c.l.b16 %v1183
      %v1207 = vunpack.c.h.b16 %v1183
      %v1208 = vpack.c.b16 %v1192, %v1192
      %v1209 = vpack.c.b16 %v1193, %v1193
      %v1210 = vpack.c.b16 %v1194, %v1194
      %v1211 = vpack.c.b16 %v1195, %v1195
      %v1212 = vpack.c.b16 %v1196, %v1196
      %v1213 = vpack.c.b16 %v1197, %v1197
      %v1214 = vpack.c.b16 %v1198, %v1198
      %v1215 = vpack.c.b16 %v1199, %v1199
      %v1216 = vpack.c.b16 %v1200, %v1200
      %v1217 = vpack.c.b16 %v1201, %v1201
      %v1218 = vpack.c.b16 %v1202, %v1202
      %v1219 = vpack.c.b16 %v1203, %v1203
      %v1220 = vpack.c.b16 %v1204, %v1204
      %v1221 = vpack.c.b16 %v1205, %v1205
      %v1222 = vpack.c.b16 %v1206, %v1206
      %v1223 = vpack.c.b16 %v1207, %v1207
      %vm1240 = vcmask 519168
      %1241 = vst.msk [vmem:[%s200] sm:$0xf] %vm1240, %v1208
      %1242 = vst.msk [vmem:[%s200 + $0x4] sm:$0xf] %vm1240, %v1209
      %1243 = vst.msk [vmem:[%s200 + $0x8] sm:$0xf] %vm1240, %v1210
      %1244 = vst.msk [vmem:[%s200 + $0xc] sm:$0xf] %vm1240, %v1211
      %1245 = vst.msk [vmem:[%s200 + $0x10] sm:$0xf] %vm1240, %v1212
      %1246 = vst.msk [vmem:[%s200 + $0x14] sm:$0xf] %vm1240, %v1213
      %1247 = vst.msk [vmem:[%s200 + $0x18] sm:$0xf] %vm1240, %v1214
      %1248 = vst.msk [vmem:[%s200 + $0x1c] sm:$0xf] %vm1240, %v1215
      %1249 = vst.msk [vmem:[%s200 + $0x20] sm:$0xf] %vm1240, %v1216
      %1250 = vst.msk [vmem:[%s200 + $0x24] sm:$0xf] %vm1240, %v1217
      %1251 = vst.msk [vmem:[%s200 + $0x28] sm:$0xf] %vm1240, %v1218
      %1252 = vst.msk [vmem:[%s200 + $0x2c] sm:$0xf] %vm1240, %v1219
      %1253 = vst.msk [vmem:[%s200 + $0x30] sm:$0xf] %vm1240, %v1220
      %1254 = vst.msk [vmem:[%s200 + $0x34] sm:$0xf] %vm1240, %v1221
      %1255 = vst.msk [vmem:[%s200 + $0x38] sm:$0xf] %vm1240, %v1222
      %1256 = vst.msk [vmem:[%s200 + $0x3c] sm:$0xf] %vm1240, %v1223
      %p1257 = scmp.lt.s32.totalorder %s19, 1
      %s1258 = scalar_select %p1257, %s19, 1
      %p1259 = scmp.lt.s32.totalorder %s20, 0
      %s1260 = scalar_select %p1259, %s20, 0
      %s1261 = smul.addr %s1258, 16
      %s1262 = sadd.s32 %s1260, %s1261
      %s1263 = smul.addr %s1262, 4
      %s1264 = scalar_lea.vmem %s2, %s1263
      %s1265 = sadd.s32 %s19, %s20
      %p1266 = scmp.lt.s32.totalorder %s1265, 1
      %s1267 = scalar_select %p1266, %s1265, 1
      %s1268 = smul.addr %s1267, 2
      %s1269 = scalar_lea.vmem %s3, %s1268
      // Predicated region
      $region29: #{downsample_conv.2} parent=27 // pred_check
        %p1270 = pneg %p94
      $region30: #{downsample_conv.2} parent=27 // pred_check_branch
        %1272 = sbr.rel (%p1270) target = $region32
      $region31: #{downsample_conv.2} parent=27 // pred_region
        _
      $region32: #{downsample_conv.2} parent=27 // pred_fallthru
        _
      // Predicated region
      $region33: #{downsample_conv.2} parent=27 // pred_check
        %p1273 = pneg %p122
      $region34: #{downsample_conv.2} parent=27 // pred_check_branch
        %1275 = sbr.rel (%p1273) target = $region36
      $region35: #{downsample_conv.2} parent=27 // pred_region
        %s1276 = sadd.s32 %s19, %s20
      $region36: #{downsample_conv.2} parent=27 // pred_fallthru
        _
    $region28: #{downsample_conv.2} parent=5 // pred_fallthru
      _
    %p1277 = scmp.le.s32.totalorder 2, %s10
    // Predicated region
    $region37: #{downsample_conv.2} parent=5 // pred_check
      %p1278 = pneg %p1277
    $region38: #{downsample_conv.2} parent=5 // pred_check_branch
      %1280 = sbr.rel (%p1278) target = $region40
    $region39: #{downsample_conv.2} parent=5 // pred_region
      %s1281 = ssub.s32 %s10, 2
      // Predicated region
      $region41: #{downsample_conv.2} parent=39 // pred_check
        %p1282 = pneg %p100
      $region42: #{downsample_conv.2} parent=39 // pred_check_branch
        %1284 = sbr.rel (%p1282) target = $region44
      $region43: #{downsample_conv.2} parent=39 // pred_region
        %p1285 = scmp.lt.s32.totalorder %s21, 1
        %s1286 = scalar_select %p1285, %s21, 1
        %p1287 = scmp.lt.s32.totalorder %s22, 0
        %s1288 = scalar_select %p1287, %s22, 0
        %s1289 = smul.addr %s1286, 16
        %s1290 = sadd.s32 %s1288, %s1289
        %s1291 = smul.addr %s1290, 4
        %s1292 = scalar_lea.vmem %s2, %s1291
      $region44: #{downsample_conv.2} parent=39 // pred_fallthru
        _
      // Predicated region
      $region45: #{downsample_conv.2} parent=39 // pred_check
        %p1293 = pneg %p128
      $region46: #{downsample_conv.2} parent=39 // pred_check_branch
        %1295 = sbr.rel (%p1293) target = $region48
      $region47: #{downsample_conv.2} parent=39 // pred_region
        %s1296 = sadd.s32 %s21, %s22
        %p1297 = scmp.lt.s32.totalorder %s1296, 1
        %s1298 = scalar_select %p1297, %s1296, 1
        %s1299 = smul.addr %s1298, 2
        %s1300 = scalar_lea.vmem %s3, %s1299
      $region48: #{downsample_conv.2} parent=39 // pred_fallthru
        _
    $region40: #{downsample_conv.2} parent=5 // pred_fallthru
      _
  $region6: #{downsample_conv.2} parent=0 // loop_footer
    %s14 = sadd.s32 1, %s10
  $region7: #{downsample_conv.2} parent=0 // loop_footer_branch
    %9 = sbr.rel target = $region3
  $region8: #{downsample_conv.2} parent=0 // loop_exit
    _

</llo_original>
